<compile_context>
chip_gen: v7x
topology: tpu7x:2x2x1
jax: 0.10.0
libtpu: 0.0.40
codegen_flags: <defaults>
</compile_context>

<pallas_src>
import jax
import jax.numpy as jnp
import numpy as np
from jax import lax
from jax.experimental import pallas as pl
from jax.experimental.pallas import tpu as pltpu


TV_FC = 256                    # vocab tile: fills the 256-wide MXU on v6e/v7x, lane-dense stores
TR_FC_TARGET = 512             # target row tile for the FC projection
TC_MAX = 32                    # max time-chunk length for the recurrence grid
B_PAD = 8                      # batch padded to a full sublane group
VMEM_LIMIT = 32 * 1024 * 1024  # raises v5e's 16 MiB scoped default; within v6e/v7x budgets


def _round_up(x, m):
    return (x + m - 1) // m * m


def _pick_tile(total, target, step):
    """Largest multiple of `step` <= target that divides `total` (total % step == 0)."""
    t = min(target, total)
    t -= t % step
    while t > step and total % t:
        t -= step
    return max(t, step)


def make_lstm_recurrence_kernel(TC, Bp, E, H, unroll):
    """One time-chunk of the LSTM recurrence; h/c carried across chunks in VMEM scratch."""

    def kernel(x_ref, wih_ref, uhh_ref, b_ref, h_out_ref, hc_ref, xw_ref):
        # x_ref   : (TC, Bp, E)   time-major chunk of embedded inputs
        # wih_ref : (E, 4H)       fused input->hidden weights  [i | f | g | o]
        # uhh_ref : (H, 4H)       fused hidden->hidden weights [i | f | g | o]
        # b_ref   : (1, 4H)       fused bias (b_ih + b_hh)
        # h_out   : (Bp, TC, H)   batch-major hidden states for this chunk (kernel output)
        # hc_ref  : (2, Bp, H)    VMEM carry (h, c) across time chunks (grid steps)
        # xw_ref  : (TC, Bp, 4H)  VMEM scratch: x @ W_ih + b for the whole chunk

        @pl.when(pl.program_id(0) == 0)
        def _():
            hc_ref[...] = jnp.zeros_like(hc_ref)

        # Hoisted, batched input projection: one MXU matmul per chunk instead of TC small ones.
        # TODO(synk): for large E/H also cast these MXU operands to bf16 (state stays f32).
        xw = jnp.dot(x_ref[...].reshape(TC * Bp, E), wih_ref[...],
                     preferred_element_type=jnp.float32) + b_ref[...]
        xw_ref[...] = xw.reshape(TC, Bp, 4 * H)

        def sigmoid(v):
            # 0.5*tanh(0.5x)+0.5 == sigmoid(x): 1 EUP push + cheap VPU affine
            # (vs exp + reciprocal), shortens the serial per-timestep path.
            return 0.5 * jnp.tanh(0.5 * v) + 0.5

        def step(t, carry):
            h, c = carry
            # Only the (Bp, H) x (H, 4H) recurrent matmul remains on the serial path.
            gates = xw_ref[t] + jnp.dot(h, uhh_ref[...],
                                        preferred_element_type=jnp.float32)   # (Bp, 4H)
            # NOTE: keep H a multiple of 128 at real sizes so these are vreg-aligned slices.
            i = sigmoid(gates[:, 0:H])
            f = sigmoid(gates[:, H:2 * H])
            g = jnp.tanh(gates[:, 2 * H:3 * H])
            o = sigmoid(gates[:, 3 * H:4 * H])
            c_new = f * c + i * g
            h_new = o * jnp.tanh(c_new)
            h_out_ref[:, pl.ds(t, 1), :] = h_new[:, None, :]    # batch-major store
            return h_new, c_new

        h, c = lax.fori_loop(0, TC, step, (hc_ref[0], hc_ref[1]), unroll=unroll)
        hc_ref[0] = h
        hc_ref[1] = c

    return kernel


def fc_proj_kernel(h_ref, wfc_ref, bfc_ref, out_ref):
    """Final linear layer tile: bf16 (TR, H) x (H, TV) MXU matmul, f32 accumulate + f32 bias."""
    out_ref[...] = (jnp.dot(h_ref[...], wfc_ref[...],
                            preferred_element_type=jnp.float32)
                    + bfc_ref[...])


def simple_model_forward(x_ids, params):
    """x_ids: (B, T) int32 token ids.  Returns (B, T, vocab) f32 logits."""
    B, T = x_ids.shape
    E = params["emb"].shape[1]
    H = params["uhh"].shape[0]
    V = params["wfc"].shape[1]
    Vp = params["wfc_p"].shape[1]

    Bp = _round_up(max(B, B_PAD), B_PAD)
    TC = min(TC_MAX, _round_up(T, 8))
    Tp = _round_up(T, TC)

    # 1) Embedding gather directly in time-major order (transpose the tiny int ids, not floats).
    ids = jnp.zeros((Bp, Tp), jnp.int32).at[:B, :T].set(x_ids.astype(jnp.int32))
    x_tm = jnp.take(params["emb"], ids.T, axis=0)                      # (Tp, Bp, E)

    # 2) Time-chunked LSTM recurrence; h/c carried in VMEM scratch across chunks.
    h_all = pl.pallas_call(
        make_lstm_recurrence_kernel(TC, Bp, E, H, unroll=min(TC, 8)),
        out_shape=jax.ShapeDtypeStruct((Bp, Tp, H), jnp.float32),
        grid=(Tp // TC,),
        in_specs=[
            pl.BlockSpec((TC, Bp, E), lambda tc: (tc, 0, 0)),          # pipelined x chunks
            pl.BlockSpec((E, 4 * H), lambda tc: (0, 0)),
            pl.BlockSpec((H, 4 * H), lambda tc: (0, 0)),
            pl.BlockSpec((1, 4 * H), lambda tc: (0, 0)),
        ],
        out_specs=pl.BlockSpec((Bp, TC, H), lambda tc: (0, tc, 0)),
        scratch_shapes=[
            pltpu.VMEM((2, Bp, H), jnp.float32),       # (h, c) carry across grid steps
            pltpu.VMEM((TC, Bp, 4 * H), jnp.float32),  # hoisted x @ W_ih + b per chunk
        ],
        compiler_params=pltpu.CompilerParams(
            dimension_semantics=("arbitrary",),        # sequential carry over time chunks
            vmem_limit_bytes=VMEM_LIMIT),
    )(x_tm, params["wih"], params["uhh"], params["b"])

    # 3) Vocab projection: 2-D parallel grid (row tiles x 256-wide vocab tiles),
    #    bf16 MXU operands, f32 accumulation.  Output is already batch-major.
    rows = Bp * Tp
    TR = _pick_tile(rows, TR_FC_TARGET, 8)
    h_flat = h_all.reshape(rows, H).astype(jnp.bfloat16)

    out_flat = pl.pallas_call(
        fc_proj_kernel,
        out_shape=jax.ShapeDtypeStruct((rows, Vp), jnp.float32),
        grid=(rows // TR, Vp // TV_FC),
        in_specs=[
            pl.BlockSpec((TR, H), lambda i, j: (i, 0)),
            pl.BlockSpec((H, TV_FC), lambda i, j: (0, j)),
            pl.BlockSpec((1, TV_FC), lambda i, j: (0, j)),
        ],
        out_specs=pl.BlockSpec((TR, TV_FC), lambda i, j: (i, j)),
        compiler_params=pltpu.CompilerParams(
            dimension_semantics=("parallel", "parallel"),
            vmem_limit_bytes=VMEM_LIMIT),
    )(h_flat, params["wfc_p"], params["bfc_p"])

    # Already batch-major: free reshape + un-padding slices only (no logits transpose).
    return out_flat.reshape(Bp, Tp, Vp)[:B, :T, :V]


def init_params(key, vocab_size, embedding_dim, hidden_dim):
    """Torch-style init; fused gate layout [i|f|g|o]; FC weight padded/cast ONCE here."""
    ks = jax.random.split(key, 7)
    H = hidden_dim
    k = 1.0 / np.sqrt(hidden_dim)

    emb = jax.random.normal(ks[0], (vocab_size, embedding_dim), jnp.float32)
    w_ih = jax.random.uniform(ks[1], (4 * H, embedding_dim), jnp.float32, -k, k)
    w_hh = jax.random.uniform(ks[2], (4 * H, H), jnp.float32, -k, k)
    b_ih = jax.random.uniform(ks[3], (4 * H,), jnp.float32, -k, k)
    b_hh = jax.random.uniform(ks[4], (4 * H,), jnp.float32, -k, k)
    w_fc = jax.random.uniform(ks[5], (vocab_size, H), jnp.float32, -k, k)
    b_fc = jax.random.uniform(ks[6], (vocab_size,), jnp.float32, -k, k)

    V = vocab_size
    Vp = _round_up(V, TV_FC)
    wfc = w_fc.T                                   # (H, V)  f32 (reference)
    bfc = b_fc[None, :]                            # (1, V)  f32 (reference)
    # Pad + cast once at init (not per forward call): lane-dense Vp, bf16 MXU operand.
    wfc_p = jnp.zeros((H, Vp), jnp.float32).at[:, :V].set(wfc).astype(jnp.bfloat16)
    bfc_p = jnp.zeros((1, Vp), jnp.float32).at[:, :V].set(bfc)

    return dict(
        emb=emb,
        wih=w_ih.T,                     # (E, 4H), columns ordered i|f|g|o (torch gate order)
        uhh=w_hh.T,                     # (H, 4H)
        b=(b_ih + b_hh)[None, :],       # (1, 4H)
        wfc=wfc, bfc=bfc,               # unpadded f32 (used by the pure-JAX reference only)
        wfc_p=wfc_p, bfc_p=bfc_p,       # kernel operands (padded, bf16 weight / f32 bias)
    )


def reference_forward(x_ids, params):
    """Pure-JAX f32 reference (same math as torch Embedding -> LSTM -> Linear)."""
    emb = params["emb"][x_ids]                        # (B, T, E)
    B, T, _ = emb.shape
    H = params["uhh"].shape[0]

    def step(carry, x_t):
        h, c = carry
        gates = x_t @ params["wih"] + h @ params["uhh"] + params["b"]
        i = jax.nn.sigmoid(gates[:, 0:H])
        f = jax.nn.sigmoid(gates[:, H:2 * H])
        g = jnp.tanh(gates[:, 2 * H:3 * H])
        o = jax.nn.sigmoid(gates[:, 3 * H:4 * H])
        c = f * c + i * g
        h = o * jnp.tanh(c)
        return (h, c), h

    xs = jnp.transpose(emb, (1, 0, 2))                # (T, B, E)
    _, hs = lax.scan(step, (jnp.zeros((B, H)), jnp.zeros((B, H))), xs)
    out = hs @ params["wfc"] + params["bfc"]          # (T, B, V)
    return jnp.transpose(out, (1, 0, 2))


if __name__ == "__main__":
    vocab_size, embedding_dim, hidden_dim = 64, 32, 32
    B, T = 2, 8

    key = jax.random.PRNGKey(0)
    kp, kx = jax.random.split(key)
    params = init_params(kp, vocab_size, embedding_dim, hidden_dim)
    x = jax.random.randint(kx, (B, T), 0, vocab_size, dtype=jnp.int32)

    fwd = jax.jit(simple_model_forward)
    out = jax.block_until_ready(fwd(x, params))
    assert out.shape == (B, T, vocab_size), out.shape
    assert out.dtype == jnp.float32

    ref = jax.block_until_ready(reference_forward(x, params))
    # Tolerance loosened (2e-2) because the FC projection uses bf16 MXU operands
    # with f32 accumulation, per the performance review.
    np.testing.assert_allclose(np.asarray(out), np.asarray(ref), rtol=2e-2, atol=2e-2)

    print("KERNEL_OK")
</pallas_src>

<mosaic_0001>
module attributes {stable_mosaic.version = 11 : i64} {
  func.func @fc_proj_kernel(%arg0: i32, %arg1: i32, %arg2: memref<64x32xbf16, #tpu.memory_space<vmem>>, %arg3: memref<32x256xbf16, #tpu.memory_space<vmem>>, %arg4: memref<1x256xf32, #tpu.memory_space<vmem>>, %arg5: memref<64x256xf32, #tpu.memory_space<vmem>>) attributes {dimension_semantics = [#tpu.dimension_semantics<parallel>, #tpu.dimension_semantics<parallel>], iteration_bounds = array<i64: 1, 1>, scalar_prefetch = 0 : i64, scratch_operands = 0 : i64, tpu.core_type = #tpu.core_type<tc>, window_params = [{transform_indices = @transform_0, window_bounds = array<i64: 64, 32>}, {transform_indices = @transform_1, window_bounds = array<i64: 32, 256>}, {transform_indices = @transform_2, window_bounds = array<i64: 1, 256>}, {transform_indices = @transform_3, window_bounds = array<i64: 64, 256>}]} {
    %c0 = arith.constant 0 : index
    %c0_0 = arith.constant 0 : index
    %0 = vector.load %arg2[%c0, %c0_0] : memref<64x32xbf16, #tpu.memory_space<vmem>>, vector<64x32xbf16>
    %c0_1 = arith.constant 0 : index
    %c0_2 = arith.constant 0 : index
    %1 = vector.load %arg3[%c0_1, %c0_2] : memref<32x256xbf16, #tpu.memory_space<vmem>>, vector<32x256xbf16>
    %cst = arith.constant dense<0.000000e+00> : vector<64x256xf32>
    %2 = tpu.matmul %0, %1, %cst {dimension_numbers = #tpu.dot_dimension_numbers<[1], [0], [0], [1], [0, 0, 1, 1], [], []>} : vector<64x32xbf16>, vector<32x256xbf16>, vector<64x256xf32> -> vector<64x256xf32>
    %c0_3 = arith.constant 0 : index
    %c0_4 = arith.constant 0 : index
    %3 = vector.load %arg4[%c0_3, %c0_4] : memref<1x256xf32, #tpu.memory_space<vmem>>, vector<1x256xf32>
    %4 = vector.broadcast %3 : vector<1x256xf32> to vector<64x256xf32>
    %5 = arith.addf %2, %4 : vector<64x256xf32>
    %c0_5 = arith.constant 0 : index
    %c0_6 = arith.constant 0 : index
    %6 = vector.load %arg5[%c0_5, %c0_6] : memref<64x256xf32, #tpu.memory_space<vmem>>, vector<64x256xf32>
    tpu.vector_store %arg5[%c0_5, %c0_6], %5 {strides = array<i32>} : memref<64x256xf32, #tpu.memory_space<vmem>>, vector<64x256xf32>,
    return
  }
  func.func @transform_0(%arg0: i32, %arg1: i32) -> (i32, i32) {
    %c0_i32 = arith.constant 0 : i32
    %c0_i32_0 = arith.constant 0 : i32
    return %arg0, %c0_i32 : i32, i32
  }
  func.func @transform_1(%arg0: i32, %arg1: i32) -> (i32, i32) {
    %c0_i32 = arith.constant 0 : i32
    %c0_i32_0 = arith.constant 0 : i32
    return %c0_i32, %arg1 : i32, i32
  }
  func.func @transform_2(%arg0: i32, %arg1: i32) -> (i32, i32) {
    %c0_i32 = arith.constant 0 : i32
    %c0_i32_0 = arith.constant 0 : i32
    return %c0_i32, %arg1 : i32, i32
  }
  func.func @transform_3(%arg0: i32, %arg1: i32) -> (i32, i32) {
    %c0_i32 = arith.constant 0 : i32
    return %arg0, %arg1 : i32, i32
  }
}

module attributes {stable_mosaic.version = 11 : i64} {
  func.func @kernel(%arg0: i32, %arg1: memref<8x8x32xf32, #tpu.memory_space<vmem>>, %arg2: memref<32x128xf32, #tpu.memory_space<vmem>>, %arg3: memref<32x128xf32, #tpu.memory_space<vmem>>, %arg4: memref<1x128xf32, #tpu.memory_space<vmem>>, %arg5: memref<8x8x32xf32, #tpu.memory_space<vmem>>, %arg6: memref<2x8x32xf32, #tpu.memory_space<vmem>>, %arg7: memref<8x8x128xf32, #tpu.memory_space<vmem>>) attributes {dimension_semantics = [#tpu.dimension_semantics<arbitrary>], iteration_bounds = array<i64: 1>, scalar_prefetch = 0 : i64, scratch_operands = 2 : i64, tpu.core_type = #tpu.core_type<tc>, window_params = [{transform_indices = @transform_0, window_bounds = array<i64: 8, 8, 32>}, {pipeline_mode = #tpu.pipeline_mode<synchronous>, transform_indices = @transform_1, window_bounds = array<i64: 32, 128>}, {pipeline_mode = #tpu.pipeline_mode<synchronous>, transform_indices = @transform_2, window_bounds = array<i64: 32, 128>}, {pipeline_mode = #tpu.pipeline_mode<synchronous>, transform_indices = @transform_3, window_bounds = array<i64: 1, 128>}, {transform_indices = @transform_4, window_bounds = array<i64: 8, 8, 32>}]} {
    %c0_i32 = arith.constant 0 : i32
    %0 = arith.cmpi eq, %arg0, %c0_i32 : i32
    %1 = arith.extui %0 : i1 to i32
    %c0_i32_0 = arith.constant 0 : i32
    %2 = arith.cmpi ne, %1, %c0_i32_0 : i32
    scf.if %2 {
      %cst_150 = arith.constant 0.000000e+00 : f32
      %342 = vector.broadcast %cst_150 : f32 to vector<2x8x32xf32>
      %c0_151 = arith.constant 0 : index
      %c0_152 = arith.constant 0 : index
      %c0_153 = arith.constant 0 : index
      %343 = vector.load %arg6[%c0_151, %c0_152, %c0_153] : memref<2x8x32xf32, #tpu.memory_space<vmem>>, vector<2x8x32xf32>
      tpu.vector_store %arg6[%c0_151, %c0_152, %c0_153], %342 {strides = array<i32>} : memref<2x8x32xf32, #tpu.memory_space<vmem>>, vector<2x8x32xf32>,
    } else {
    }
    %c0 = arith.constant 0 : index
    %c0_1 = arith.constant 0 : index
    %c0_2 = arith.constant 0 : index
    %3 = vector.load %arg1[%c0, %c0_1, %c0_2] : memref<8x8x32xf32, #tpu.memory_space<vmem>>, vector<8x8x32xf32>
    %4 = vector.shape_cast %3 : vector<8x8x32xf32> to vector<64x32xf32>
    %c0_3 = arith.constant 0 : index
    %c0_4 = arith.constant 0 : index
    %5 = vector.load %arg2[%c0_3, %c0_4] : memref<32x128xf32, #tpu.memory_space<vmem>>, vector<32x128xf32>
    %cst = arith.constant dense<0.000000e+00> : vector<64x128xf32>
    %6 = tpu.matmul %4, %5, %cst {dimension_numbers = #tpu.dot_dimension_numbers<[1], [0], [0], [1], [0, 0, 1, 1], [], []>} : vector<64x32xf32>, vector<32x128xf32>, vector<64x128xf32> -> vector<64x128xf32>
    %c0_5 = arith.constant 0 : index
    %c0_6 = arith.constant 0 : index
    %7 = vector.load %arg4[%c0_5, %c0_6] : memref<1x128xf32, #tpu.memory_space<vmem>>, vector<1x128xf32>
    %8 = vector.broadcast %7 : vector<1x128xf32> to vector<64x128xf32>
    %9 = arith.addf %6, %8 : vector<64x128xf32>
    %10 = vector.shape_cast %9 : vector<64x128xf32> to vector<8x8x128xf32>
    %c0_7 = arith.constant 0 : index
    %c0_8 = arith.constant 0 : index
    %c0_9 = arith.constant 0 : index
    %11 = vector.load %arg7[%c0_7, %c0_8, %c0_9] : memref<8x8x128xf32, #tpu.memory_space<vmem>>, vector<8x8x128xf32>
    tpu.vector_store %arg7[%c0_7, %c0_8, %c0_9], %10 {strides = array<i32>} : memref<8x8x128xf32, #tpu.memory_space<vmem>>, vector<8x8x128xf32>,
    %c0_10 = arith.constant 0 : index
    %c0_11 = arith.constant 0 : index
    %c0_12 = arith.constant 0 : index
    %12 = vector.load %arg6[%c0_10, %c0_11, %c0_12] : memref<2x8x32xf32, #tpu.memory_space<vmem>>, vector<1x8x32xf32>
    %13 = vector.shape_cast %12 : vector<1x8x32xf32> to vector<8x32xf32>
    %c1 = arith.constant 1 : index
    %c0_13 = arith.constant 0 : index
    %c0_14 = arith.constant 0 : index
    %14 = vector.load %arg6[%c1, %c0_13, %c0_14] : memref<2x8x32xf32, #tpu.memory_space<vmem>>, vector<1x8x32xf32>
    %15 = vector.shape_cast %14 : vector<1x8x32xf32> to vector<8x32xf32>
    %c0_i32_15 = arith.constant 0 : i32
    %16 = arith.index_cast %c0_i32_15 : i32 to index
    %c0_16 = arith.constant 0 : index
    %c0_17 = arith.constant 0 : index
    %17 = vector.load %arg7[%16, %c0_16, %c0_17] : memref<8x8x128xf32, #tpu.memory_space<vmem>>, vector<1x8x128xf32>
    %18 = vector.shape_cast %17 : vector<1x8x128xf32> to vector<8x128xf32>
    %c0_18 = arith.constant 0 : index
    %c0_19 = arith.constant 0 : index
    %19 = vector.load %arg3[%c0_18, %c0_19] : memref<32x128xf32, #tpu.memory_space<vmem>>, vector<32x128xf32>
    %cst_20 = arith.constant dense<0.000000e+00> : vector<8x128xf32>
    %20 = tpu.matmul %13, %19, %cst_20 {dimension_numbers = #tpu.dot_dimension_numbers<[1], [0], [0], [1], [0, 0, 1, 1], [], []>} : vector<8x32xf32>, vector<32x128xf32>, vector<8x128xf32> -> vector<8x128xf32>
    %21 = arith.addf %18, %20 : vector<8x128xf32>
    %22 = vector.extract_strided_slice %21 {offsets = [0, 0], sizes = [8, 32], strides = [1, 1]} : vector<8x128xf32> to vector<8x32xf32>
    %cst_21 = arith.constant 5.000000e-01 : f32
    %23 = vector.broadcast %cst_21 : f32 to vector<8x32xf32>
    %24 = arith.mulf %23, %22 : vector<8x32xf32>
    %25 = math.tanh %24 : vector<8x32xf32>
    %cst_22 = arith.constant 5.000000e-01 : f32
    %26 = vector.broadcast %cst_22 : f32 to vector<8x32xf32>
    %27 = arith.mulf %26, %25 : vector<8x32xf32>
    %cst_23 = arith.constant 5.000000e-01 : f32
    %28 = vector.broadcast %cst_23 : f32 to vector<8x32xf32>
    %29 = arith.addf %27, %28 : vector<8x32xf32>
    %30 = vector.extract_strided_slice %21 {offsets = [0, 32], sizes = [8, 32], strides = [1, 1]} : vector<8x128xf32> to vector<8x32xf32>
    %cst_24 = arith.constant 5.000000e-01 : f32
    %31 = vector.broadcast %cst_24 : f32 to vector<8x32xf32>
    %32 = arith.mulf %31, %30 : vector<8x32xf32>
    %33 = math.tanh %32 : vector<8x32xf32>
    %cst_25 = arith.constant 5.000000e-01 : f32
    %34 = vector.broadcast %cst_25 : f32 to vector<8x32xf32>
    %35 = arith.mulf %34, %33 : vector<8x32xf32>
    %cst_26 = arith.constant 5.000000e-01 : f32
    %36 = vector.broadcast %cst_26 : f32 to vector<8x32xf32>
    %37 = arith.addf %35, %36 : vector<8x32xf32>
    %38 = vector.extract_strided_slice %21 {offsets = [0, 64], sizes = [8, 32], strides = [1, 1]} : vector<8x128xf32> to vector<8x32xf32>
    %39 = math.tanh %38 : vector<8x32xf32>
    %40 = vector.extract_strided_slice %21 {offsets = [0, 96], sizes = [8, 32], strides = [1, 1]} : vector<8x128xf32> to vector<8x32xf32>
    %cst_27 = arith.constant 5.000000e-01 : f32
    %41 = vector.broadcast %cst_27 : f32 to vector<8x32xf32>
    %42 = arith.mulf %41, %40 : vector<8x32xf32>
    %43 = math.tanh %42 : vector<8x32xf32>
    %cst_28 = arith.constant 5.000000e-01 : f32
    %44 = vector.broadcast %cst_28 : f32 to vector<8x32xf32>
    %45 = arith.mulf %44, %43 : vector<8x32xf32>
    %cst_29 = arith.constant 5.000000e-01 : f32
    %46 = vector.broadcast %cst_29 : f32 to vector<8x32xf32>
    %47 = arith.addf %45, %46 : vector<8x32xf32>
    %48 = arith.mulf %37, %15 : vector<8x32xf32>
    %49 = arith.mulf %29, %39 : vector<8x32xf32>
    %50 = arith.addf %48, %49 : vector<8x32xf32>
    %51 = math.tanh %50 : vector<8x32xf32>
    %52 = arith.mulf %47, %51 : vector<8x32xf32>
    %53 = vector.shape_cast %52 : vector<8x32xf32> to vector<8x1x32xf32>
    %c0_30 = arith.constant 0 : index
    %54 = arith.index_cast %c0_i32_15 : i32 to index
    %c0_31 = arith.constant 0 : index
    %55 = vector.load %arg5[%c0_30, %54, %c0_31] : memref<8x8x32xf32, #tpu.memory_space<vmem>>, vector<8x1x32xf32>
    tpu.vector_store %arg5[%c0_30, %54, %c0_31], %53 {strides = array<i32>} : memref<8x8x32xf32, #tpu.memory_space<vmem>>, vector<8x1x32xf32>,
    %c1_i32 = arith.constant 1 : i32
    %56 = arith.index_cast %c1_i32 : i32 to index
    %c0_32 = arith.constant 0 : index
    %c0_33 = arith.constant 0 : index
    %57 = vector.load %arg7[%56, %c0_32, %c0_33] : memref<8x8x128xf32, #tpu.memory_space<vmem>>, vector<1x8x128xf32>
    %58 = vector.shape_cast %57 : vector<1x8x128xf32> to vector<8x128xf32>
    %c0_34 = arith.constant 0 : index
    %c0_35 = arith.constant 0 : index
    %59 = vector.load %arg3[%c0_34, %c0_35] : memref<32x128xf32, #tpu.memory_space<vmem>>, vector<32x128xf32>
    %cst_36 = arith.constant dense<0.000000e+00> : vector<8x128xf32>
    %60 = tpu.matmul %52, %59, %cst_36 {dimension_numbers = #tpu.dot_dimension_numbers<[1], [0], [0], [1], [0, 0, 1, 1], [], []>} : vector<8x32xf32>, vector<32x128xf32>, vector<8x128xf32> -> vector<8x128xf32>
    %61 = arith.addf %58, %60 : vector<8x128xf32>
    %62 = vector.extract_strided_slice %61 {offsets = [0, 0], sizes = [8, 32], strides = [1, 1]} : vector<8x128xf32> to vector<8x32xf32>
    %cst_37 = arith.constant 5.000000e-01 : f32
    %63 = vector.broadcast %cst_37 : f32 to vector<8x32xf32>
    %64 = arith.mulf %63, %62 : vector<8x32xf32>
    %65 = math.tanh %64 : vector<8x32xf32>
    %cst_38 = arith.constant 5.000000e-01 : f32
    %66 = vector.broadcast %cst_38 : f32 to vector<8x32xf32>
    %67 = arith.mulf %66, %65 : vector<8x32xf32>
    %cst_39 = arith.constant 5.000000e-01 : f32
    %68 = vector.broadcast %cst_39 : f32 to vector<8x32xf32>
    %69 = arith.addf %67, %68 : vector<8x32xf32>
    %70 = vector.extract_strided_slice %61 {offsets = [0, 32], sizes = [8, 32], strides = [1, 1]} : vector<8x128xf32> to vector<8x32xf32>
    %cst_40 = arith.constant 5.000000e-01 : f32
    %71 = vector.broadcast %cst_40 : f32 to vector<8x32xf32>
    %72 = arith.mulf %71, %70 : vector<8x32xf32>
    %73 = math.tanh %72 : vector<8x32xf32>
    %cst_41 = arith.constant 5.000000e-01 : f32
    %74 = vector.broadcast %cst_41 : f32 to vector<8x32xf32>
    %75 = arith.mulf %74, %73 : vector<8x32xf32>
    %cst_42 = arith.constant 5.000000e-01 : f32
    %76 = vector.broadcast %cst_42 : f32 to vector<8x32xf32>
    %77 = arith.addf %75, %76 : vector<8x32xf32>
    %78 = vector.extract_strided_slice %61 {offsets = [0, 64], sizes = [8, 32], strides = [1, 1]} : vector<8x128xf32> to vector<8x32xf32>
    %79 = math.tanh %78 : vector<8x32xf32>
    %80 = vector.extract_strided_slice %61 {offsets = [0, 96], sizes = [8, 32], strides = [1, 1]} : vector<8x128xf32> to vector<8x32xf32>
    %cst_43 = arith.constant 5.000000e-01 : f32
    %81 = vector.broadcast %cst_43 : f32 to vector<8x32xf32>
    %82 = arith.mulf %81, %80 : vector<8x32xf32>
    %83 = math.tanh %82 : vector<8x32xf32>
    %cst_44 = arith.constant 5.000000e-01 : f32
    %84 = vector.broadcast %cst_44 : f32 to vector<8x32xf32>
    %85 = arith.mulf %84, %83 : vector<8x32xf32>
    %cst_45 = arith.constant 5.000000e-01 : f32
    %86 = vector.broadcast %cst_45 : f32 to vector<8x32xf32>
    %87 = arith.addf %85, %86 : vector<8x32xf32>
    %88 = arith.mulf %77, %50 : vector<8x32xf32>
    %89 = arith.mulf %69, %79 : vector<8x32xf32>
    %90 = arith.addf %88, %89 : vector<8x32xf32>
    %91 = math.tanh %90 : vector<8x32xf32>
    %92 = arith.mulf %87, %91 : vector<8x32xf32>
    %93 = vector.shape_cast %92 : vector<8x32xf32> to vector<8x1x32xf32>
    %c0_46 = arith.constant 0 : index
    %94 = arith.index_cast %c1_i32 : i32 to index
    %c0_47 = arith.constant 0 : index
    %95 = vector.load %arg5[%c0_46, %94, %c0_47] : memref<8x8x32xf32, #tpu.memory_space<vmem>>, vector<8x1x32xf32>
    tpu.vector_store %arg5[%c0_46, %94, %c0_47], %93 {strides = array<i32>} : memref<8x8x32xf32, #tpu.memory_space<vmem>>, vector<8x1x32xf32>,
    %c2_i32 = arith.constant 2 : i32
    %96 = arith.index_cast %c2_i32 : i32 to index
    %c0_48 = arith.constant 0 : index
    %c0_49 = arith.constant 0 : index
    %97 = vector.load %arg7[%96, %c0_48, %c0_49] : memref<8x8x128xf32, #tpu.memory_space<vmem>>, vector<1x8x128xf32>
    %98 = vector.shape_cast %97 : vector<1x8x128xf32> to vector<8x128xf32>
    %c0_50 = arith.constant 0 : index
    %c0_51 = arith.constant 0 : index
    %99 = vector.load %arg3[%c0_50, %c0_51] : memref<32x128xf32, #tpu.memory_space<vmem>>, vector<32x128xf32>
    %cst_52 = arith.constant dense<0.000000e+00> : vector<8x128xf32>
    %100 = tpu.matmul %92, %99, %cst_52 {dimension_numbers = #tpu.dot_dimension_numbers<[1], [0], [0], [1], [0, 0, 1, 1], [], []>} : vector<8x32xf32>, vector<32x128xf32>, vector<8x128xf32> -> vector<8x128xf32>
    %101 = arith.addf %98, %100 : vector<8x128xf32>
    %102 = vector.extract_strided_slice %101 {offsets = [0, 0], sizes = [8, 32], strides = [1, 1]} : vector<8x128xf32> to vector<8x32xf32>
    %cst_53 = arith.constant 5.000000e-01 : f32
    %103 = vector.broadcast %cst_53 : f32 to vector<8x32xf32>
    %104 = arith.mulf %103, %102 : vector<8x32xf32>
    %105 = math.tanh %104 : vector<8x32xf32>
    %cst_54 = arith.constant 5.000000e-01 : f32
    %106 = vector.broadcast %cst_54 : f32 to vector<8x32xf32>
    %107 = arith.mulf %106, %105 : vector<8x32xf32>
    %cst_55 = arith.constant 5.000000e-01 : f32
    %108 = vector.broadcast %cst_55 : f32 to vector<8x32xf32>
    %109 = arith.addf %107, %108 : vector<8x32xf32>
    %110 = vector.extract_strided_slice %101 {offsets = [0, 32], sizes = [8, 32], strides = [1, 1]} : vector<8x128xf32> to vector<8x32xf32>
    %cst_56 = arith.constant 5.000000e-01 : f32
    %111 = vector.broadcast %cst_56 : f32 to vector<8x32xf32>
    %112 = arith.mulf %111, %110 : vector<8x32xf32>
    %113 = math.tanh %112 : vector<8x32xf32>
    %cst_57 = arith.constant 5.000000e-01 : f32
    %114 = vector.broadcast %cst_57 : f32 to vector<8x32xf32>
    %115 = arith.mulf %114, %113 : vector<8x32xf32>
    %cst_58 = arith.constant 5.000000e-01 : f32
    %116 = vector.broadcast %cst_58 : f32 to vector<8x32xf32>
    %117 = arith.addf %115, %116 : vector<8x32xf32>
    %118 = vector.extract_strided_slice %101 {offsets = [0, 64], sizes = [8, 32], strides = [1, 1]} : vector<8x128xf32> to vector<8x32xf32>
    %119 = math.tanh %118 : vector<8x32xf32>
    %120 = vector.extract_strided_slice %101 {offsets = [0, 96], sizes = [8, 32], strides = [1, 1]} : vector<8x128xf32> to vector<8x32xf32>
    %cst_59 = arith.constant 5.000000e-01 : f32
    %121 = vector.broadcast %cst_59 : f32 to vector<8x32xf32>
    %122 = arith.mulf %121, %120 : vector<8x32xf32>
    %123 = math.tanh %122 : vector<8x32xf32>
    %cst_60 = arith.constant 5.000000e-01 : f32
    %124 = vector.broadcast %cst_60 : f32 to vector<8x32xf32>
    %125 = arith.mulf %124, %123 : vector<8x32xf32>
    %cst_61 = arith.constant 5.000000e-01 : f32
    %126 = vector.broadcast %cst_61 : f32 to vector<8x32xf32>
    %127 = arith.addf %125, %126 : vector<8x32xf32>
    %128 = arith.mulf %117, %90 : vector<8x32xf32>
    %129 = arith.mulf %109, %119 : vector<8x32xf32>
    %130 = arith.addf %128, %129 : vector<8x32xf32>
    %131 = math.tanh %130 : vector<8x32xf32>
    %132 = arith.mulf %127, %131 : vector<8x32xf32>
    %133 = vector.shape_cast %132 : vector<8x32xf32> to vector<8x1x32xf32>
    %c0_62 = arith.constant 0 : index
    %134 = arith.index_cast %c2_i32 : i32 to index
    %c0_63 = arith.constant 0 : index
    %135 = vector.load %arg5[%c0_62, %134, %c0_63] : memref<8x8x32xf32, #tpu.memory_space<vmem>>, vector<8x1x32xf32>
    tpu.vector_store %arg5[%c0_62, %134, %c0_63], %133 {strides = array<i32>} : memref<8x8x32xf32, #tpu.memory_space<vmem>>, vector<8x1x32xf32>,
    %c3_i32 = arith.constant 3 : i32
    %136 = arith.index_cast %c3_i32 : i32 to index
    %c0_64 = arith.constant 0 : index
    %c0_65 = arith.constant 0 : index
    %137 = vector.load %arg7[%136, %c0_64, %c0_65] : memref<8x8x128xf32, #tpu.memory_space<vmem>>, vector<1x8x128xf32>
    %138 = vector.shape_cast %137 : vector<1x8x128xf32> to vector<8x128xf32>
    %c0_66 = arith.constant 0 : index
    %c0_67 = arith.constant 0 : index
    %139 = vector.load %arg3[%c0_66, %c0_67] : memref<32x128xf32, #tpu.memory_space<vmem>>, vector<32x128xf32>
    %cst_68 = arith.constant dense<0.000000e+00> : vector<8x128xf32>
    %140 = tpu.matmul %132, %139, %cst_68 {dimension_numbers = #tpu.dot_dimension_numbers<[1], [0], [0], [1], [0, 0, 1, 1], [], []>} : vector<8x32xf32>, vector<32x128xf32>, vector<8x128xf32> -> vector<8x128xf32>
    %141 = arith.addf %138, %140 : vector<8x128xf32>
    %142 = vector.extract_strided_slice %141 {offsets = [0, 0], sizes = [8, 32], strides = [1, 1]} : vector<8x128xf32> to vector<8x32xf32>
    %cst_69 = arith.constant 5.000000e-01 : f32
    %143 = vector.broadcast %cst_69 : f32 to vector<8x32xf32>
    %144 = arith.mulf %143, %142 : vector<8x32xf32>
    %145 = math.tanh %144 : vector<8x32xf32>
    %cst_70 = arith.constant 5.000000e-01 : f32
    %146 = vector.broadcast %cst_70 : f32 to vector<8x32xf32>
    %147 = arith.mulf %146, %145 : vector<8x32xf32>
    %cst_71 = arith.constant 5.000000e-01 : f32
    %148 = vector.broadcast %cst_71 : f32 to vector<8x32xf32>
    %149 = arith.addf %147, %148 : vector<8x32xf32>
    %150 = vector.extract_strided_slice %141 {offsets = [0, 32], sizes = [8, 32], strides = [1, 1]} : vector<8x128xf32> to vector<8x32xf32>
    %cst_72 = arith.constant 5.000000e-01 : f32
    %151 = vector.broadcast %cst_72 : f32 to vector<8x32xf32>
    %152 = arith.mulf %151, %150 : vector<8x32xf32>
    %153 = math.tanh %152 : vector<8x32xf32>
    %cst_73 = arith.constant 5.000000e-01 : f32
    %154 = vector.broadcast %cst_73 : f32 to vector<8x32xf32>
    %155 = arith.mulf %154, %153 : vector<8x32xf32>
    %cst_74 = arith.constant 5.000000e-01 : f32
    %156 = vector.broadcast %cst_74 : f32 to vector<8x32xf32>
    %157 = arith.addf %155, %156 : vector<8x32xf32>
    %158 = vector.extract_strided_slice %141 {offsets = [0, 64], sizes = [8, 32], strides = [1, 1]} : vector<8x128xf32> to vector<8x32xf32>
    %159 = math.tanh %158 : vector<8x32xf32>
    %160 = vector.extract_strided_slice %141 {offsets = [0, 96], sizes = [8, 32], strides = [1, 1]} : vector<8x128xf32> to vector<8x32xf32>
    %cst_75 = arith.constant 5.000000e-01 : f32
    %161 = vector.broadcast %cst_75 : f32 to vector<8x32xf32>
    %162 = arith.mulf %161, %160 : vector<8x32xf32>
    %163 = math.tanh %162 : vector<8x32xf32>
    %cst_76 = arith.constant 5.000000e-01 : f32
    %164 = vector.broadcast %cst_76 : f32 to vector<8x32xf32>
    %165 = arith.mulf %164, %163 : vector<8x32xf32>
    %cst_77 = arith.constant 5.000000e-01 : f32
    %166 = vector.broadcast %cst_77 : f32 to vector<8x32xf32>
    %167 = arith.addf %165, %166 : vector<8x32xf32>
    %168 = arith.mulf %157, %130 : vector<8x32xf32>
    %169 = arith.mulf %149, %159 : vector<8x32xf32>
    %170 = arith.addf %168, %169 : vector<8x32xf32>
    %171 = math.tanh %170 : vector<8x32xf32>
    %172 = arith.mulf %167, %171 : vector<8x32xf32>
    %173 = vector.shape_cast %172 : vector<8x32xf32> to vector<8x1x32xf32>
    %c0_78 = arith.constant 0 : index
    %174 = arith.index_cast %c3_i32 : i32 to index
    %c0_79 = arith.constant 0 : index
    %175 = vector.load %arg5[%c0_78, %174, %c0_79] : memref<8x8x32xf32, #tpu.memory_space<vmem>>, vector<8x1x32xf32>
    tpu.vector_store %arg5[%c0_78, %174, %c0_79], %173 {strides = array<i32>} : memref<8x8x32xf32, #tpu.memory_space<vmem>>, vector<8x1x32xf32>,
    %c4_i32 = arith.constant 4 : i32
    %176 = arith.index_cast %c4_i32 : i32 to index
    %c0_80 = arith.constant 0 : index
    %c0_81 = arith.constant 0 : index
    %177 = vector.load %arg7[%176, %c0_80, %c0_81] : memref<8x8x128xf32, #tpu.memory_space<vmem>>, vector<1x8x128xf32>
    %178 = vector.shape_cast %177 : vector<1x8x128xf32> to vector<8x128xf32>
    %c0_82 = arith.constant 0 : index
    %c0_83 = arith.constant 0 : index
    %179 = vector.load %arg3[%c0_82, %c0_83] : memref<32x128xf32, #tpu.memory_space<vmem>>, vector<32x128xf32>
    %cst_84 = arith.constant dense<0.000000e+00> : vector<8x128xf32>
    %180 = tpu.matmul %172, %179, %cst_84 {dimension_numbers = #tpu.dot_dimension_numbers<[1], [0], [0], [1], [0, 0, 1, 1], [], []>} : vector<8x32xf32>, vector<32x128xf32>, vector<8x128xf32> -> vector<8x128xf32>
    %181 = arith.addf %178, %180 : vector<8x128xf32>
    %182 = vector.extract_strided_slice %181 {offsets = [0, 0], sizes = [8, 32], strides = [1, 1]} : vector<8x128xf32> to vector<8x32xf32>
    %cst_85 = arith.constant 5.000000e-01 : f32
    %183 = vector.broadcast %cst_85 : f32 to vector<8x32xf32>
    %184 = arith.mulf %183, %182 : vector<8x32xf32>
    %185 = math.tanh %184 : vector<8x32xf32>
    %cst_86 = arith.constant 5.000000e-01 : f32
    %186 = vector.broadcast %cst_86 : f32 to vector<8x32xf32>
    %187 = arith.mulf %186, %185 : vector<8x32xf32>
    %cst_87 = arith.constant 5.000000e-01 : f32
    %188 = vector.broadcast %cst_87 : f32 to vector<8x32xf32>
    %189 = arith.addf %187, %188 : vector<8x32xf32>
    %190 = vector.extract_strided_slice %181 {offsets = [0, 32], sizes = [8, 32], strides = [1, 1]} : vector<8x128xf32> to vector<8x32xf32>
    %cst_88 = arith.constant 5.000000e-01 : f32
    %191 = vector.broadcast %cst_88 : f32 to vector<8x32xf32>
    %192 = arith.mulf %191, %190 : vector<8x32xf32>
    %193 = math.tanh %192 : vector<8x32xf32>
    %cst_89 = arith.constant 5.000000e-01 : f32
    %194 = vector.broadcast %cst_89 : f32 to vector<8x32xf32>
    %195 = arith.mulf %194, %193 : vector<8x32xf32>
    %cst_90 = arith.constant 5.000000e-01 : f32
    %196 = vector.broadcast %cst_90 : f32 to vector<8x32xf32>
    %197 = arith.addf %195, %196 : vector<8x32xf32>
    %198 = vector.extract_strided_slice %181 {offsets = [0, 64], sizes = [8, 32], strides = [1, 1]} : vector<8x128xf32> to vector<8x32xf32>
    %199 = math.tanh %198 : vector<8x32xf32>
    %200 = vector.extract_strided_slice %181 {offsets = [0, 96], sizes = [8, 32], strides = [1, 1]} : vector<8x128xf32> to vector<8x32xf32>
    %cst_91 = arith.constant 5.000000e-01 : f32
    %201 = vector.broadcast %cst_91 : f32 to vector<8x32xf32>
    %202 = arith.mulf %201, %200 : vector<8x32xf32>
    %203 = math.tanh %202 : vector<8x32xf32>
    %cst_92 = arith.constant 5.000000e-01 : f32
    %204 = vector.broadcast %cst_92 : f32 to vector<8x32xf32>
    %205 = arith.mulf %204, %203 : vector<8x32xf32>
    %cst_93 = arith.constant 5.000000e-01 : f32
    %206 = vector.broadcast %cst_93 : f32 to vector<8x32xf32>
    %207 = arith.addf %205, %206 : vector<8x32xf32>
    %208 = arith.mulf %197, %170 : vector<8x32xf32>
    %209 = arith.mulf %189, %199 : vector<8x32xf32>
    %210 = arith.addf %208, %209 : vector<8x32xf32>
    %211 = math.tanh %210 : vector<8x32xf32>
    %212 = arith.mulf %207, %211 : vector<8x32xf32>
    %213 = vector.shape_cast %212 : vector<8x32xf32> to vector<8x1x32xf32>
    %c0_94 = arith.constant 0 : index
    %214 = arith.index_cast %c4_i32 : i32 to index
    %c0_95 = arith.constant 0 : index
    %215 = vector.load %arg5[%c0_94, %214, %c0_95] : memref<8x8x32xf32, #tpu.memory_space<vmem>>, vector<8x1x32xf32>
    tpu.vector_store %arg5[%c0_94, %214, %c0_95], %213 {strides = array<i32>} : memref<8x8x32xf32, #tpu.memory_space<vmem>>, vector<8x1x32xf32>,
    %c5_i32 = arith.constant 5 : i32
    %216 = arith.index_cast %c5_i32 : i32 to index
    %c0_96 = arith.constant 0 : index
    %c0_97 = arith.constant 0 : index
    %217 = vector.load %arg7[%216, %c0_96, %c0_97] : memref<8x8x128xf32, #tpu.memory_space<vmem>>, vector<1x8x128xf32>
    %218 = vector.shape_cast %217 : vector<1x8x128xf32> to vector<8x128xf32>
    %c0_98 = arith.constant 0 : index
    %c0_99 = arith.constant 0 : index
    %219 = vector.load %arg3[%c0_98, %c0_99] : memref<32x128xf32, #tpu.memory_space<vmem>>, vector<32x128xf32>
    %cst_100 = arith.constant dense<0.000000e+00> : vector<8x128xf32>
    %220 = tpu.matmul %212, %219, %cst_100 {dimension_numbers = #tpu.dot_dimension_numbers<[1], [0], [0], [1], [0, 0, 1, 1], [], []>} : vector<8x32xf32>, vector<32x128xf32>, vector<8x128xf32> -> vector<8x128xf32>
    %221 = arith.addf %218, %220 : vector<8x128xf32>
    %222 = vector.extract_strided_slice %221 {offsets = [0, 0], sizes = [8, 32], strides = [1, 1]} : vector<8x128xf32> to vector<8x32xf32>
    %cst_101 = arith.constant 5.000000e-01 : f32
    %223 = vector.broadcast %cst_101 : f32 to vector<8x32xf32>
    %224 = arith.mulf %223, %222 : vector<8x32xf32>
    %225 = math.tanh %224 : vector<8x32xf32>
    %cst_102 = arith.constant 5.000000e-01 : f32
    %226 = vector.broadcast %cst_102 : f32 to vector<8x32xf32>
    %227 = arith.mulf %226, %225 : vector<8x32xf32>
    %cst_103 = arith.constant 5.000000e-01 : f32
    %228 = vector.broadcast %cst_103 : f32 to vector<8x32xf32>
    %229 = arith.addf %227, %228 : vector<8x32xf32>
    %230 = vector.extract_strided_slice %221 {offsets = [0, 32], sizes = [8, 32], strides = [1, 1]} : vector<8x128xf32> to vector<8x32xf32>
    %cst_104 = arith.constant 5.000000e-01 : f32
    %231 = vector.broadcast %cst_104 : f32 to vector<8x32xf32>
    %232 = arith.mulf %231, %230 : vector<8x32xf32>
    %233 = math.tanh %232 : vector<8x32xf32>
    %cst_105 = arith.constant 5.000000e-01 : f32
    %234 = vector.broadcast %cst_105 : f32 to vector<8x32xf32>
    %235 = arith.mulf %234, %233 : vector<8x32xf32>
    %cst_106 = arith.constant 5.000000e-01 : f32
    %236 = vector.broadcast %cst_106 : f32 to vector<8x32xf32>
    %237 = arith.addf %235, %236 : vector<8x32xf32>
    %238 = vector.extract_strided_slice %221 {offsets = [0, 64], sizes = [8, 32], strides = [1, 1]} : vector<8x128xf32> to vector<8x32xf32>
    %239 = math.tanh %238 : vector<8x32xf32>
    %240 = vector.extract_strided_slice %221 {offsets = [0, 96], sizes = [8, 32], strides = [1, 1]} : vector<8x128xf32> to vector<8x32xf32>
    %cst_107 = arith.constant 5.000000e-01 : f32
    %241 = vector.broadcast %cst_107 : f32 to vector<8x32xf32>
    %242 = arith.mulf %241, %240 : vector<8x32xf32>
    %243 = math.tanh %242 : vector<8x32xf32>
    %cst_108 = arith.constant 5.000000e-01 : f32
    %244 = vector.broadcast %cst_108 : f32 to vector<8x32xf32>
    %245 = arith.mulf %244, %243 : vector<8x32xf32>
    %cst_109 = arith.constant 5.000000e-01 : f32
    %246 = vector.broadcast %cst_109 : f32 to vector<8x32xf32>
    %247 = arith.addf %245, %246 : vector<8x32xf32>
    %248 = arith.mulf %237, %210 : vector<8x32xf32>
    %249 = arith.mulf %229, %239 : vector<8x32xf32>
    %250 = arith.addf %248, %249 : vector<8x32xf32>
    %251 = math.tanh %250 : vector<8x32xf32>
    %252 = arith.mulf %247, %251 : vector<8x32xf32>
    %253 = vector.shape_cast %252 : vector<8x32xf32> to vector<8x1x32xf32>
    %c0_110 = arith.constant 0 : index
    %254 = arith.index_cast %c5_i32 : i32 to index
    %c0_111 = arith.constant 0 : index
    %255 = vector.load %arg5[%c0_110, %254, %c0_111] : memref<8x8x32xf32, #tpu.memory_space<vmem>>, vector<8x1x32xf32>
    tpu.vector_store %arg5[%c0_110, %254, %c0_111], %253 {strides = array<i32>} : memref<8x8x32xf32, #tpu.memory_space<vmem>>, vector<8x1x32xf32>,
    %c6_i32 = arith.constant 6 : i32
    %256 = arith.index_cast %c6_i32 : i32 to index
    %c0_112 = arith.constant 0 : index
    %c0_113 = arith.constant 0 : index
    %257 = vector.load %arg7[%256, %c0_112, %c0_113] : memref<8x8x128xf32, #tpu.memory_space<vmem>>, vector<1x8x128xf32>
    %258 = vector.shape_cast %257 : vector<1x8x128xf32> to vector<8x128xf32>
    %c0_114 = arith.constant 0 : index
    %c0_115 = arith.constant 0 : index
    %259 = vector.load %arg3[%c0_114, %c0_115] : memref<32x128xf32, #tpu.memory_space<vmem>>, vector<32x128xf32>
    %cst_116 = arith.constant dense<0.000000e+00> : vector<8x128xf32>
    %260 = tpu.matmul %252, %259, %cst_116 {dimension_numbers = #tpu.dot_dimension_numbers<[1], [0], [0], [1], [0, 0, 1, 1], [], []>} : vector<8x32xf32>, vector<32x128xf32>, vector<8x128xf32> -> vector<8x128xf32>
    %261 = arith.addf %258, %260 : vector<8x128xf32>
    %262 = vector.extract_strided_slice %261 {offsets = [0, 0], sizes = [8, 32], strides = [1, 1]} : vector<8x128xf32> to vector<8x32xf32>
    %cst_117 = arith.constant 5.000000e-01 : f32
    %263 = vector.broadcast %cst_117 : f32 to vector<8x32xf32>
    %264 = arith.mulf %263, %262 : vector<8x32xf32>
    %265 = math.tanh %264 : vector<8x32xf32>
    %cst_118 = arith.constant 5.000000e-01 : f32
    %266 = vector.broadcast %cst_118 : f32 to vector<8x32xf32>
    %267 = arith.mulf %266, %265 : vector<8x32xf32>
    %cst_119 = arith.constant 5.000000e-01 : f32
    %268 = vector.broadcast %cst_119 : f32 to vector<8x32xf32>
    %269 = arith.addf %267, %268 : vector<8x32xf32>
    %270 = vector.extract_strided_slice %261 {offsets = [0, 32], sizes = [8, 32], strides = [1, 1]} : vector<8x128xf32> to vector<8x32xf32>
    %cst_120 = arith.constant 5.000000e-01 : f32
    %271 = vector.broadcast %cst_120 : f32 to vector<8x32xf32>
    %272 = arith.mulf %271, %270 : vector<8x32xf32>
    %273 = math.tanh %272 : vector<8x32xf32>
    %cst_121 = arith.constant 5.000000e-01 : f32
    %274 = vector.broadcast %cst_121 : f32 to vector<8x32xf32>
    %275 = arith.mulf %274, %273 : vector<8x32xf32>
    %cst_122 = arith.constant 5.000000e-01 : f32
    %276 = vector.broadcast %cst_122 : f32 to vector<8x32xf32>
    %277 = arith.addf %275, %276 : vector<8x32xf32>
    %278 = vector.extract_strided_slice %261 {offsets = [0, 64], sizes = [8, 32], strides = [1, 1]} : vector<8x128xf32> to vector<8x32xf32>
    %279 = math.tanh %278 : vector<8x32xf32>
    %280 = vector.extract_strided_slice %261 {offsets = [0, 96], sizes = [8, 32], strides = [1, 1]} : vector<8x128xf32> to vector<8x32xf32>
    %cst_123 = arith.constant 5.000000e-01 : f32
    %281 = vector.broadcast %cst_123 : f32 to vector<8x32xf32>
    %282 = arith.mulf %281, %280 : vector<8x32xf32>
    %283 = math.tanh %282 : vector<8x32xf32>
    %cst_124 = arith.constant 5.000000e-01 : f32
    %284 = vector.broadcast %cst_124 : f32 to vector<8x32xf32>
    %285 = arith.mulf %284, %283 : vector<8x32xf32>
    %cst_125 = arith.constant 5.000000e-01 : f32
    %286 = vector.broadcast %cst_125 : f32 to vector<8x32xf32>
    %287 = arith.addf %285, %286 : vector<8x32xf32>
    %288 = arith.mulf %277, %250 : vector<8x32xf32>
    %289 = arith.mulf %269, %279 : vector<8x32xf32>
    %290 = arith.addf %288, %289 : vector<8x32xf32>
    %291 = math.tanh %290 : vector<8x32xf32>
    %292 = arith.mulf %287, %291 : vector<8x32xf32>
    %293 = vector.shape_cast %292 : vector<8x32xf32> to vector<8x1x32xf32>
    %c0_126 = arith.constant 0 : index
    %294 = arith.index_cast %c6_i32 : i32 to index
    %c0_127 = arith.constant 0 : index
    %295 = vector.load %arg5[%c0_126, %294, %c0_127] : memref<8x8x32xf32, #tpu.memory_space<vmem>>, vector<8x1x32xf32>
    tpu.vector_store %arg5[%c0_126, %294, %c0_127], %293 {strides = array<i32>} : memref<8x8x32xf32, #tpu.memory_space<vmem>>, vector<8x1x32xf32>,
    %c7_i32 = arith.constant 7 : i32
    %296 = arith.index_cast %c7_i32 : i32 to index
    %c0_128 = arith.constant 0 : index
    %c0_129 = arith.constant 0 : index
    %297 = vector.load %arg7[%296, %c0_128, %c0_129] : memref<8x8x128xf32, #tpu.memory_space<vmem>>, vector<1x8x128xf32>
    %298 = vector.shape_cast %297 : vector<1x8x128xf32> to vector<8x128xf32>
    %c0_130 = arith.constant 0 : index
    %c0_131 = arith.constant 0 : index
    %299 = vector.load %arg3[%c0_130, %c0_131] : memref<32x128xf32, #tpu.memory_space<vmem>>, vector<32x128xf32>
    %cst_132 = arith.constant dense<0.000000e+00> : vector<8x128xf32>
    %300 = tpu.matmul %292, %299, %cst_132 {dimension_numbers = #tpu.dot_dimension_numbers<[1], [0], [0], [1], [0, 0, 1, 1], [], []>} : vector<8x32xf32>, vector<32x128xf32>, vector<8x128xf32> -> vector<8x128xf32>
    %301 = arith.addf %298, %300 : vector<8x128xf32>
    %302 = vector.extract_strided_slice %301 {offsets = [0, 0], sizes = [8, 32], strides = [1, 1]} : vector<8x128xf32> to vector<8x32xf32>
    %cst_133 = arith.constant 5.000000e-01 : f32
    %303 = vector.broadcast %cst_133 : f32 to vector<8x32xf32>
    %304 = arith.mulf %303, %302 : vector<8x32xf32>
    %305 = math.tanh %304 : vector<8x32xf32>
    %cst_134 = arith.constant 5.000000e-01 : f32
    %306 = vector.broadcast %cst_134 : f32 to vector<8x32xf32>
    %307 = arith.mulf %306, %305 : vector<8x32xf32>
    %cst_135 = arith.constant 5.000000e-01 : f32
    %308 = vector.broadcast %cst_135 : f32 to vector<8x32xf32>
    %309 = arith.addf %307, %308 : vector<8x32xf32>
    %310 = vector.extract_strided_slice %301 {offsets = [0, 32], sizes = [8, 32], strides = [1, 1]} : vector<8x128xf32> to vector<8x32xf32>
    %cst_136 = arith.constant 5.000000e-01 : f32
    %311 = vector.broadcast %cst_136 : f32 to vector<8x32xf32>
    %312 = arith.mulf %311, %310 : vector<8x32xf32>
    %313 = math.tanh %312 : vector<8x32xf32>
    %cst_137 = arith.constant 5.000000e-01 : f32
    %314 = vector.broadcast %cst_137 : f32 to vector<8x32xf32>
    %315 = arith.mulf %314, %313 : vector<8x32xf32>
    %cst_138 = arith.constant 5.000000e-01 : f32
    %316 = vector.broadcast %cst_138 : f32 to vector<8x32xf32>
    %317 = arith.addf %315, %316 : vector<8x32xf32>
    %318 = vector.extract_strided_slice %301 {offsets = [0, 64], sizes = [8, 32], strides = [1, 1]} : vector<8x128xf32> to vector<8x32xf32>
    %319 = math.tanh %318 : vector<8x32xf32>
    %320 = vector.extract_strided_slice %301 {offsets = [0, 96], sizes = [8, 32], strides = [1, 1]} : vector<8x128xf32> to vector<8x32xf32>
    %cst_139 = arith.constant 5.000000e-01 : f32
    %321 = vector.broadcast %cst_139 : f32 to vector<8x32xf32>
    %322 = arith.mulf %321, %320 : vector<8x32xf32>
    %323 = math.tanh %322 : vector<8x32xf32>
    %cst_140 = arith.constant 5.000000e-01 : f32
    %324 = vector.broadcast %cst_140 : f32 to vector<8x32xf32>
    %325 = arith.mulf %324, %323 : vector<8x32xf32>
    %cst_141 = arith.constant 5.000000e-01 : f32
    %326 = vector.broadcast %cst_141 : f32 to vector<8x32xf32>
    %327 = arith.addf %325, %326 : vector<8x32xf32>
    %328 = arith.mulf %317, %290 : vector<8x32xf32>
    %329 = arith.mulf %309, %319 : vector<8x32xf32>
    %330 = arith.addf %328, %329 : vector<8x32xf32>
    %331 = math.tanh %330 : vector<8x32xf32>
    %332 = arith.mulf %327, %331 : vector<8x32xf32>
    %333 = vector.shape_cast %332 : vector<8x32xf32> to vector<8x1x32xf32>
    %c0_142 = arith.constant 0 : index
    %334 = arith.index_cast %c7_i32 : i32 to index
    %c0_143 = arith.constant 0 : index
    %335 = vector.load %arg5[%c0_142, %334, %c0_143] : memref<8x8x32xf32, #tpu.memory_space<vmem>>, vector<8x1x32xf32>
    tpu.vector_store %arg5[%c0_142, %334, %c0_143], %333 {strides = array<i32>} : memref<8x8x32xf32, #tpu.memory_space<vmem>>, vector<8x1x32xf32>,
    %c8_i32 = arith.constant 8 : i32
    %c0_144 = arith.constant 0 : index
    %c0_145 = arith.constant 0 : index
    %c0_146 = arith.constant 0 : index
    %336 = vector.load %arg6[%c0_144, %c0_145, %c0_146] : memref<2x8x32xf32, #tpu.memory_space<vmem>>, vector<1x8x32xf32>
    %337 = vector.shape_cast %336 : vector<1x8x32xf32> to vector<8x32xf32>
    %338 = vector.shape_cast %332 : vector<8x32xf32> to vector<1x8x32xf32>
    tpu.vector_store %arg6[%c0_144, %c0_145, %c0_146], %338 {strides = array<i32>} : memref<2x8x32xf32, #tpu.memory_space<vmem>>, vector<1x8x32xf32>,
    %c1_147 = arith.constant 1 : index
    %c0_148 = arith.constant 0 : index
    %c0_149 = arith.constant 0 : index
    %339 = vector.load %arg6[%c1_147, %c0_148, %c0_149] : memref<2x8x32xf32, #tpu.memory_space<vmem>>, vector<1x8x32xf32>
    %340 = vector.shape_cast %339 : vector<1x8x32xf32> to vector<8x32xf32>
    %341 = vector.shape_cast %330 : vector<8x32xf32> to vector<1x8x32xf32>
    tpu.vector_store %arg6[%c1_147, %c0_148, %c0_149], %341 {strides = array<i32>} : memref<2x8x32xf32, #tpu.memory_space<vmem>>, vector<1x8x32xf32>,
    return
  }
  func.func @transform_0(%arg0: i32) -> (i32, i32, i32) {
    %c0_i32 = arith.constant 0 : i32
    %c0_i32_0 = arith.constant 0 : i32
    %c0_i32_1 = arith.constant 0 : i32
    return %arg0, %c0_i32, %c0_i32_0 : i32, i32, i32
  }
  func.func @transform_1(%arg0: i32) -> (i32, i32) {
    %c0_i32 = arith.constant 0 : i32
    %c0_i32_0 = arith.constant 0 : i32
    %c0_i32_1 = arith.constant 0 : i32
    return %c0_i32, %c0_i32_0 : i32, i32
  }
  func.func @transform_2(%arg0: i32) -> (i32, i32) {
    %c0_i32 = arith.constant 0 : i32
    %c0_i32_0 = arith.constant 0 : i32
    %c0_i32_1 = arith.constant 0 : i32
    return %c0_i32, %c0_i32_0 : i32, i32
  }
  func.func @transform_3(%arg0: i32) -> (i32, i32) {
    %c0_i32 = arith.constant 0 : i32
    %c0_i32_0 = arith.constant 0 : i32
    %c0_i32_1 = arith.constant 0 : i32
    return %c0_i32, %c0_i32_0 : i32, i32
  }
  func.func @transform_4(%arg0: i32) -> (i32, i32, i32) {
    %c0_i32 = arith.constant 0 : i32
    %c0_i32_0 = arith.constant 0 : i32
    %c0_i32_1 = arith.constant 0 : i32
    return %c0_i32, %arg0, %c0_i32_0 : i32, i32, i32
  }
}

</mosaic_0001>

<llo_original>
// kernel: simple_model_forward.3
$region0: #{simple_model_forward.3}
  #allocation0 [shape = 'u32[]', space=smem, size = 0x4, offset = 0x4, fixed_abs, tag = 'smem constant byte address 0x4 - core index']
  #allocation1 [shape = 'u32[144,128]{1,0:T(1,128)}', space=vmem, size = 0x12000, scoped, tag = 'internal scratch']
  %s0 = inlined_call_operand.vmem [shape: bf16[64,32], index: 0, kind: input, shape index: {}]
  %s1 = inlined_call_operand.vmem [shape: bf16[32,256], index: 1, kind: input, shape index: {}]
  %s2 = inlined_call_operand.vmem [shape: f32[1,256], index: 2, kind: input, shape index: {}]
  %s3 = inlined_call_operand.vmem [shape: f32[64,256], index: 3, kind: output, shape index: {}]
  %s4 = sld [smem:[#allocation0]]
  $region22: #{simple_model_forward.3} parent=0
    _
  %s6 = ssub.s32 1, %s4
  %s7 = scalar_select 0, %s6, %s4
  // Predicated region
  $region2: #{simple_model_forward.3} parent=0 // pred_check
    _
  $region3: #{simple_model_forward.3} parent=0 // pred_check_branch
    %9 = sbr.rel (0) target = $region5
  $region4: #{simple_model_forward.3} parent=0 // pred_region
    _
  $region5: #{simple_model_forward.3} parent=0 // pred_fallthru
    _
  // Predicated region
  $region6: #{simple_model_forward.3} parent=0 // pred_check
    _
  $region7: #{simple_model_forward.3} parent=0 // pred_check_branch
    %11 = sbr.rel (0) target = $region9
  $region8: #{simple_model_forward.3} parent=0 // pred_region
    _
  $region9: #{simple_model_forward.3} parent=0 // pred_fallthru
    _
  // Predicated region
  $region10: #{simple_model_forward.3} parent=0 // pred_check
    _
  $region11: #{simple_model_forward.3} parent=0 // pred_check_branch
    %13 = sbr.rel (0) target = $region13
  $region12: #{simple_model_forward.3} parent=0 // pred_region
    _
  $region13: #{simple_model_forward.3} parent=0 // pred_fallthru
    _
  %v15 = vld [vmem:[%s0] sm:$0xf]
  %v16 = vld [vmem:[%s0 + $0x4] sm:$0xf]
  %v17 = vld [vmem:[%s0 + $0x8] sm:$0xf]
  %v18 = vld [vmem:[%s0 + $0xc] sm:$0xf]
  %v19 = vld [vmem:[%s0 + $0x10] sm:$0xf]
  %v20 = vld [vmem:[%s0 + $0x14] sm:$0xf]
  %v21 = vld [vmem:[%s0 + $0x18] sm:$0xf]
  %v22 = vld [vmem:[%s0 + $0x1c] sm:$0xf]
  %v23 = vld [vmem:[%s1] sm:$0xff]
  %v24 = vld [vmem:[%s1 + $0x8] sm:$0xff]
  %v25 = vld [vmem:[%s1 + $0x10] sm:$0xff]
  %v26 = vld [vmem:[%s1 + $0x18] sm:$0xff]
  %v27 = vld [vmem:[%s2] sm:$0x3]
  %v29 = vlaneseq
  %v30 = vshrl.u32 %v29, 7
  %v31 = vsub.s32 0, %v30
  %v32 = vrot.slane %v27, %v31
  %v33 = vlaneseq
  %v34 = vshrl.u32 %v33, 7
  %v35 = vsub.s32 1, %v34
  %v36 = vrot.slane %v27, %v35
  %v47 = vunpack.c.l.b16 %v15
  %v48 = vunpack.c.l.b16 %v16
  %v49 = vunpack.c.l.b16 %v17
  %v50 = vunpack.c.l.b16 %v18
  %v51 = vunpack.c.l.b16 %v19
  %v52 = vunpack.c.l.b16 %v20
  %v53 = vunpack.c.l.b16 %v21
  %v54 = vunpack.c.l.b16 %v22
  %v55 = vpack.c.b16 %v48, %v47
  %v56 = vpack.c.b16 %v50, %v49
  %v57 = vpack.c.b16 %v52, %v51
  %v58 = vpack.c.b16 %v54, %v53
  %v63 = vunpack.c.l.b16 %v23
  %v64 = vunpack.c.h.b16 %v23
  %v65 = vunpack.c.l.b16 %v24
  %v66 = vunpack.c.h.b16 %v24
  %v67 = vunpack.c.l.b16 %v25
  %v68 = vunpack.c.h.b16 %v25
  %v69 = vunpack.c.l.b16 %v26
  %v70 = vunpack.c.h.b16 %v26
  %v71 = vpack.c.b16 %v65, %v63
  %v72 = vpack.c.b16 %v66, %v64
  %v73 = vpack.c.b16 %v69, %v67
  %v74 = vpack.c.b16 %v70, %v68
  %vm79 = vcmask 261120
  %v81 = vsel %vm79, %v55, 0
  %v84 = vsel %vm79, %v56, 0
  %v87 = vsel %vm79, %v57, 0
  %v90 = vsel %vm79, %v58, 0
  %92 = vmatprep.subr.bf16.mxu0 %v72
  %93 = vmatpush1.bf16.msra.mxu0 %v71
  %94 = vmatprep.subr.bf16.mxu0 %v74
  %95 = vmatpush1.bf16.msra.mxu0 %v73
  %96 = vmatprep.subr.bf16.mxu0 0
  %97 = vmatpush1.bf16.msra.mxu0 0
  %98 = vmatprep.subr.bf16.mxu0 0
  %99 = vmatpush1.bf16.msra.mxu0 0
  %100 = vmatprep.subr.bf16.mxu0 0
  %101 = vmatpush1.bf16.msra.mxu0 0
  %102 = vmatprep.subr.bf16.mxu0 0
  %103 = vmatpush1.bf16.msra.mxu0 0
  %104 = vmatprep.subr.bf16.mxu0 0
  %105 = vmatpush1.bf16.msra.mxu0 0
  %106 = vmatprep.subr.bf16.mxu0 0
  %107 = vmatpush1.bf16.msra.mxu0 0
  %108 = vmatprep.subr.bf16.mxu0 0
  %109 = vmatpush1.bf16.msra.mxu0 0
  %110 = vmatprep.subr.bf16.mxu0 0
  %111 = vmatpush1.bf16.msra.mxu0 0
  %112 = vmatprep.subr.bf16.mxu0 0
  %113 = vmatpush1.bf16.msra.mxu0 0
  %114 = vmatprep.subr.bf16.mxu0 0
  %115 = vmatpush1.bf16.msra.mxu0 0
  %116 = vmatprep.subr.bf16.mxu0 0
  %117 = vmatpush1.bf16.msra.mxu0 0
  %118 = vmatprep.subr.bf16.mxu0 0
  %119 = vmatpush1.bf16.msra.mxu0 0
  %120 = vmatprep.subr.bf16.mxu0 0
  %121 = vmatpush1.bf16.msra.mxu0 0
  %122 = vmatprep.subr.bf16.mxu0 0
  %123 = vmatpush1.bf16.msra.mxu0 0
  %124 = vmatprep.mubr.bf16.mxu0 0
  %125 = vmatmul.mubr.bf16.gmra.mrb[0].mxu0 %v81
  %v126 = vpop.f32.mrb[0].mxu0
  %v127 = vadd.f32 %v32, %v126
  %v128 = vpop.f32.mrb[0].mxu0
  %v129 = vadd.f32 %v36, %v128
  %v130 = vpop.f32.mrb[0].mxu0
  %v131 = vadd.f32 %v32, %v130
  %v132 = vpop.f32.mrb[0].mxu0
  %v133 = vadd.f32 %v36, %v132
  %134 = vmatprep.mubr.bf16.mxu0 0
  %135 = vmatmul.mubr.bf16.gmra.mrb[0].mxu0 %v84
  %v136 = vpop.f32.mrb[0].mxu0
  %v137 = vadd.f32 %v32, %v136
  %v138 = vpop.f32.mrb[0].mxu0
  %v139 = vadd.f32 %v36, %v138
  %v140 = vpop.f32.mrb[0].mxu0
  %v141 = vadd.f32 %v32, %v140
  %v142 = vpop.f32.mrb[0].mxu0
  %v143 = vadd.f32 %v36, %v142
  %144 = vmatprep.mubr.bf16.mxu0 0
  %145 = vmatmul.mubr.bf16.gmra.mrb[0].mxu0 %v87
  %v146 = vpop.f32.mrb[0].mxu0
  %v147 = vadd.f32 %v32, %v146
  %v148 = vpop.f32.mrb[0].mxu0
  %v149 = vadd.f32 %v36, %v148
  %v150 = vpop.f32.mrb[0].mxu0
  %v151 = vadd.f32 %v32, %v150
  %v152 = vpop.f32.mrb[0].mxu0
  %v153 = vadd.f32 %v36, %v152
  %154 = vmatprep.mubr.bf16.mxu0 0
  %155 = vmatmul.mubr.bf16.gmra.mrb[0].mxu0 %v90
  %v156 = vpop.f32.mrb[0].mxu0
  %v157 = vadd.f32 %v32, %v156
  %v158 = vpop.f32.mrb[0].mxu0
  %v159 = vadd.f32 %v36, %v158
  %v160 = vpop.f32.mrb[0].mxu0
  %v161 = vadd.f32 %v32, %v160
  %v162 = vpop.f32.mrb[0].mxu0
  %v163 = vadd.f32 %v36, %v162
  %164 = vdwg.mxu0
  %165 = vst [vmem:[%s3] sm:$0xff] %v127
  %166 = vst [vmem:[%s3 + $0x8] sm:$0xff] %v129
  %167 = vst [vmem:[%s3 + $0x10] sm:$0xff] %v131
  %168 = vst [vmem:[%s3 + $0x18] sm:$0xff] %v133
  %169 = vst [vmem:[%s3 + $0x20] sm:$0xff] %v137
  %170 = vst [vmem:[%s3 + $0x28] sm:$0xff] %v139
  %171 = vst [vmem:[%s3 + $0x30] sm:$0xff] %v141
  %172 = vst [vmem:[%s3 + $0x38] sm:$0xff] %v143
  %173 = vst [vmem:[%s3 + $0x40] sm:$0xff] %v147
  %174 = vst [vmem:[%s3 + $0x48] sm:$0xff] %v149
  %175 = vst [vmem:[%s3 + $0x50] sm:$0xff] %v151
  %176 = vst [vmem:[%s3 + $0x58] sm:$0xff] %v153
  %177 = vst [vmem:[%s3 + $0x60] sm:$0xff] %v157
  %178 = vst [vmem:[%s3 + $0x68] sm:$0xff] %v159
  %179 = vst [vmem:[%s3 + $0x70] sm:$0xff] %v161
  %180 = vst [vmem:[%s3 + $0x78] sm:$0xff] %v163
  // Predicated region
  $region14: #{simple_model_forward.3} parent=0 // pred_check
    _
  $region15: #{simple_model_forward.3} parent=0 // pred_check_branch
    %182 = sbr.rel (0) target = $region17
  $region16: #{simple_model_forward.3} parent=0 // pred_region
    _
  $region17: #{simple_model_forward.3} parent=0 // pred_fallthru
    _
  // Predicated region
  $region18: #{simple_model_forward.3} parent=0 // pred_check
    _
  $region19: #{simple_model_forward.3} parent=0 // pred_check_branch
    %184 = sbr.rel (0) target = $region21
  $region20: #{simple_model_forward.3} parent=0 // pred_region
    _
  $region21: #{simple_model_forward.3} parent=0 // pred_fallthru
    _

// kernel: simple_model_forward.2
$region0: #{simple_model_forward.2}
  #allocation0 [shape = 'u32[]', space=smem, size = 0x4, offset = 0x4, fixed_abs, tag = 'smem constant byte address 0x4 - core index']
  #allocation1 [shape = 'u32[144,128]{1,0:T(1,128)}', space=vmem, size = 0x12000, scoped, tag = 'internal scratch']
  #allocation2 [shape = 'f32[2,8,32]{2,1,0:T(8,128)}', space=vmem, size = 0x2000, scoped, tag = 'scratch operand']
  #allocation3 [shape = 'f32[8,8,128]{2,1,0:T(8,128)}', space=vmem, size = 0x8000, scoped, tag = 'scratch operand']
  %s0 = inlined_call_operand.vmem [shape: f32[8,8,32], index: 0, kind: input, shape index: {}]
  %s1 = inlined_call_operand.vmem [shape: f32[32,128], index: 1, kind: input, shape index: {}]
  %s2 = inlined_call_operand.vmem [shape: f32[32,128], index: 2, kind: input, shape index: {}]
  %s3 = inlined_call_operand.vmem [shape: f32[1,128], index: 3, kind: input, shape index: {}]
  %s4 = inlined_call_operand.vmem [shape: f32[8,8,32], index: 4, kind: output, shape index: {}]
  %s5 = sld [smem:[#allocation0]]
  $region30: #{simple_model_forward.2} parent=0
    _
  %s7 = ssub.s32 1, %s5
  %s8 = scalar_select 0, %s7, %s5
  // Predicated region
  $region2: #{simple_model_forward.2} parent=0 // pred_check
    _
  $region3: #{simple_model_forward.2} parent=0 // pred_check_branch
    %10 = sbr.rel (0) target = $region5
  $region4: #{simple_model_forward.2} parent=0 // pred_region
    _
  $region5: #{simple_model_forward.2} parent=0 // pred_fallthru
    _
  // Predicated region
  $region6: #{simple_model_forward.2} parent=0 // pred_check
    _
  $region7: #{simple_model_forward.2} parent=0 // pred_check_branch
    %12 = sbr.rel (0) target = $region9
  $region8: #{simple_model_forward.2} parent=0 // pred_region
    _
  $region9: #{simple_model_forward.2} parent=0 // pred_fallthru
    _
  // Predicated region
  $region10: #{simple_model_forward.2} parent=0 // pred_check
    _
  $region11: #{simple_model_forward.2} parent=0 // pred_check_branch
    %14 = sbr.rel (0) target = $region13
  $region12: #{simple_model_forward.2} parent=0 // pred_region
    _
  $region13: #{simple_model_forward.2} parent=0 // pred_fallthru
    _
  // Predicated region
  $region14: #{simple_model_forward.2} parent=0 // pred_check
    _
  $region15: #{simple_model_forward.2} parent=0 // pred_check_branch
    %16 = sbr.rel (0) target = $region17
  $region16: #{simple_model_forward.2} parent=0 // pred_region
    _
  $region17: #{simple_model_forward.2} parent=0 // pred_fallthru
    _
  %p17 = scmp.eq.s32.totalorder 0, 0
  // Predicated region
  $region18: #{simple_model_forward.2} parent=0 // pred_check
    %p18 = pneg %p17
  $region19: #{simple_model_forward.2} parent=0 // pred_check_branch
    %20 = sbr.rel (%p18) target = $region21
  $region20: #{simple_model_forward.2} parent=0 // pred_region
    %vm21 = vcmask 261120
    %22 = vst.msk [vmem:[#allocation2] sm:$0xff] %vm21, 0.0
    %23 = vst.msk [vmem:[#allocation2 + $0x8] sm:$0xff] %vm21, 0.0
  $region21: #{simple_model_forward.2} parent=0 // pred_fallthru
    _
  %v24 = vld [vmem:[%s0] sm:$0xff]
  %v25 = vld [vmem:[%s0 + $0x8] sm:$0xff]
  %v26 = vld [vmem:[%s0 + $0x10] sm:$0xff]
  %v27 = vld [vmem:[%s0 + $0x18] sm:$0xff]
  %v28 = vld [vmem:[%s0 + $0x20] sm:$0xff]
  %v29 = vld [vmem:[%s0 + $0x28] sm:$0xff]
  %v30 = vld [vmem:[%s0 + $0x30] sm:$0xff]
  %v31 = vld [vmem:[%s0 + $0x38] sm:$0xff]
  %v32 = vld [vmem:[%s1] sm:$0xff]
  %v33 = vld [vmem:[%s1 + $0x8] sm:$0xff]
  %v34 = vld [vmem:[%s1 + $0x10] sm:$0xff]
  %v35 = vld [vmem:[%s1 + $0x18] sm:$0xff]
  %v36 = vld [vmem:[%s3] sm:$0x1]
  %v38 = vlaneseq
  %v39 = vshrl.u32 %v38, 7
  %v40 = vsub.s32 0, %v39
  %v41 = vrot.slane %v36, %v40
  %vm43 = vcmask 261120
  %v45 = vsel %vm43, %v24, 0
  %v48 = vsel %vm43, %v25, 0
  %v51 = vsel %vm43, %v26, 0
  %v54 = vsel %vm43, %v27, 0
  %v57 = vsel %vm43, %v28, 0
  %v60 = vsel %vm43, %v29, 0
  %v63 = vsel %vm43, %v30, 0
  %v66 = vsel %vm43, %v31, 0
  %68 = vmatprep.subr.mxu0 0.0
  %69 = vmatpush1.msra.mxu0 %v32
  %70 = vmatprep.subr.mxu0 0.0
  %71 = vmatpush1.msra.mxu0 %v33
  %72 = vmatprep.subr.mxu0 0.0
  %73 = vmatpush1.msra.mxu0 %v34
  %74 = vmatprep.subr.mxu0 0.0
  %75 = vmatpush1.msra.mxu0 %v35
  %76 = vmatprep.subr.mxu0 0.0
  %77 = vmatpush1.msra.mxu0 0.0
  %78 = vmatprep.subr.mxu0 0.0
  %79 = vmatpush1.msra.mxu0 0.0
  %80 = vmatprep.subr.mxu0 0.0
  %81 = vmatpush1.msra.mxu0 0.0
  %82 = vmatprep.subr.mxu0 0.0
  %83 = vmatpush1.msra.mxu0 0.0
  %84 = vmatprep.subr.mxu0 0.0
  %85 = vmatpush1.msra.mxu0 0.0
  %86 = vmatprep.subr.mxu0 0.0
  %87 = vmatpush1.msra.mxu0 0.0
  %88 = vmatprep.subr.mxu0 0.0
  %89 = vmatpush1.msra.mxu0 0.0
  %90 = vmatprep.subr.mxu0 0.0
  %91 = vmatpush1.msra.mxu0 0.0
  %92 = vmatprep.subr.mxu0 0.0
  %93 = vmatpush1.msra.mxu0 0.0
  %94 = vmatprep.subr.mxu0 0.0
  %95 = vmatpush1.msra.mxu0 0.0
  %96 = vmatprep.subr.mxu0 0.0
  %97 = vmatpush1.msra.mxu0 0.0
  %98 = vmatprep.subr.mxu0 0.0
  %99 = vmatpush1.msra.mxu0 0.0
  %100 = vmatprep.subr.mxu0 0.0
  %101 = vmatpush1.msra.mxu0 0.0
  %102 = vmatprep.subr.mxu0 0.0
  %103 = vmatpush1.msra.mxu0 0.0
  %104 = vmatprep.subr.mxu0 0.0
  %105 = vmatpush1.msra.mxu0 0.0
  %106 = vmatprep.subr.mxu0 0.0
  %107 = vmatpush1.msra.mxu0 0.0
  %108 = vmatprep.subr.mxu0 0.0
  %109 = vmatpush1.msra.mxu0 0.0
  %110 = vmatprep.subr.mxu0 0.0
  %111 = vmatpush1.msra.mxu0 0.0
  %112 = vmatprep.subr.mxu0 0.0
  %113 = vmatpush1.msra.mxu0 0.0
  %114 = vmatprep.subr.mxu0 0.0
  %115 = vmatpush1.msra.mxu0 0.0
  %116 = vmatprep.subr.mxu0 0.0
  %117 = vmatpush1.msra.mxu0 0.0
  %118 = vmatprep.subr.mxu0 0.0
  %119 = vmatpush1.msra.mxu0 0.0
  %120 = vmatprep.subr.mxu0 0.0
  %121 = vmatpush1.msra.mxu0 0.0
  %122 = vmatprep.subr.mxu0 0.0
  %123 = vmatpush1.msra.mxu0 0.0
  %124 = vmatprep.subr.mxu0 0.0
  %125 = vmatpush1.msra.mxu0 0.0
  %126 = vmatprep.subr.mxu0 0.0
  %127 = vmatpush1.msra.mxu0 0.0
  %128 = vmatprep.subr.mxu0 0.0
  %129 = vmatpush1.msra.mxu0 0.0
  %130 = vmatprep.subr.mxu0 0.0
  %131 = vmatpush1.msra.mxu0 0.0
  %132 = vmatprep.mubr.f32.mxu0 0.0
  %133 = vmatmul.mubr.f32.gmra.mrb[0].mxu0 %v45
  %v134 = vpop.f32.mrb[0].mxu0
  %v135 = vadd.f32 %v41, %v134
  %v136 = vpop.f32.mrb[0].mxu0
  %137 = vmatprep.mubr.f32.mxu0 0.0
  %138 = vmatmul.mubr.f32.gmra.mrb[0].mxu0 %v48
  %v139 = vpop.f32.mrb[0].mxu0
  %v140 = vadd.f32 %v41, %v139
  %v141 = vpop.f32.mrb[0].mxu0
  %142 = vmatprep.mubr.f32.mxu0 0.0
  %143 = vmatmul.mubr.f32.gmra.mrb[0].mxu0 %v51
  %v144 = vpop.f32.mrb[0].mxu0
  %v145 = vadd.f32 %v41, %v144
  %v146 = vpop.f32.mrb[0].mxu0
  %147 = vmatprep.mubr.f32.mxu0 0.0
  %148 = vmatmul.mubr.f32.gmra.mrb[0].mxu0 %v54
  %v149 = vpop.f32.mrb[0].mxu0
  %v150 = vadd.f32 %v41, %v149
  %v151 = vpop.f32.mrb[0].mxu0
  %152 = vmatprep.mubr.f32.mxu0 0.0
  %153 = vmatmul.mubr.f32.gmra.mrb[0].mxu0 %v57
  %v154 = vpop.f32.mrb[0].mxu0
  %v155 = vadd.f32 %v41, %v154
  %v156 = vpop.f32.mrb[0].mxu0
  %157 = vmatprep.mubr.f32.mxu0 0.0
  %158 = vmatmul.mubr.f32.gmra.mrb[0].mxu0 %v60
  %v159 = vpop.f32.mrb[0].mxu0
  %v160 = vadd.f32 %v41, %v159
  %v161 = vpop.f32.mrb[0].mxu0
  %162 = vmatprep.mubr.f32.mxu0 0.0
  %163 = vmatmul.mubr.f32.gmra.mrb[0].mxu0 %v63
  %v164 = vpop.f32.mrb[0].mxu0
  %v165 = vadd.f32 %v41, %v164
  %v166 = vpop.f32.mrb[0].mxu0
  %167 = vmatprep.mubr.f32.mxu0 0.0
  %168 = vmatmul.mubr.f32.gmra.mrb[0].mxu0 %v66
  %v169 = vpop.f32.mrb[0].mxu0
  %v170 = vadd.f32 %v41, %v169
  %v171 = vpop.f32.mrb[0].mxu0
  %172 = vdwg.mxu0
  %173 = vst [vmem:[#allocation3] sm:$0xff] %v135
  %174 = vst [vmem:[#allocation3 + $0x8] sm:$0xff] %v140
  %175 = vst [vmem:[#allocation3 + $0x10] sm:$0xff] %v145
  %176 = vst [vmem:[#allocation3 + $0x18] sm:$0xff] %v150
  %177 = vst [vmem:[#allocation3 + $0x20] sm:$0xff] %v155
  %178 = vst [vmem:[#allocation3 + $0x28] sm:$0xff] %v160
  %179 = vst [vmem:[#allocation3 + $0x30] sm:$0xff] %v165
  %180 = vst [vmem:[#allocation3 + $0x38] sm:$0xff] %v170
  %v181 = vld [vmem:[#allocation2] sm:$0xff]
  %s182 = scalar_lea.vmem [#allocation2], 8
  %v183 = vld [vmem:[%s182] sm:$0xff]
  %v184 = vld [vmem:[#allocation3] sm:$0xff]
  %v185 = vld [vmem:[%s2] sm:$0xff]
  %v186 = vld [vmem:[%s2 + $0x8] sm:$0xff]
  %v187 = vld [vmem:[%s2 + $0x10] sm:$0xff]
  %v188 = vld [vmem:[%s2 + $0x18] sm:$0xff]
  %v190 = vsel %vm43, %v181, 0
  %192 = vmatprep.subr.mxu0 0.0
  %193 = vmatpush1.msra.mxu0 %v185
  %194 = vmatprep.subr.mxu0 0.0
  %195 = vmatpush1.msra.mxu0 %v186
  %196 = vmatprep.subr.mxu0 0.0
  %197 = vmatpush1.msra.mxu0 %v187
  %198 = vmatprep.subr.mxu0 0.0
  %199 = vmatpush1.msra.mxu0 %v188
  %200 = vmatprep.subr.mxu0 0.0
  %201 = vmatpush1.msra.mxu0 0.0
  %202 = vmatprep.subr.mxu0 0.0
  %203 = vmatpush1.msra.mxu0 0.0
  %204 = vmatprep.subr.mxu0 0.0
  %205 = vmatpush1.msra.mxu0 0.0
  %206 = vmatprep.subr.mxu0 0.0
  %207 = vmatpush1.msra.mxu0 0.0
  %208 = vmatprep.subr.mxu0 0.0
  %209 = vmatpush1.msra.mxu0 0.0
  %210 = vmatprep.subr.mxu0 0.0
  %211 = vmatpush1.msra.mxu0 0.0
  %212 = vmatprep.subr.mxu0 0.0
  %213 = vmatpush1.msra.mxu0 0.0
  %214 = vmatprep.subr.mxu0 0.0
  %215 = vmatpush1.msra.mxu0 0.0
  %216 = vmatprep.subr.mxu0 0.0
  %217 = vmatpush1.msra.mxu0 0.0
  %218 = vmatprep.subr.mxu0 0.0
  %219 = vmatpush1.msra.mxu0 0.0
  %220 = vmatprep.subr.mxu0 0.0
  %221 = vmatpush1.msra.mxu0 0.0
  %222 = vmatprep.subr.mxu0 0.0
  %223 = vmatpush1.msra.mxu0 0.0
  %224 = vmatprep.subr.mxu0 0.0
  %225 = vmatpush1.msra.mxu0 0.0
  %226 = vmatprep.subr.mxu0 0.0
  %227 = vmatpush1.msra.mxu0 0.0
  %228 = vmatprep.subr.mxu0 0.0
  %229 = vmatpush1.msra.mxu0 0.0
  %230 = vmatprep.subr.mxu0 0.0
  %231 = vmatpush1.msra.mxu0 0.0
  %232 = vmatprep.subr.mxu0 0.0
  %233 = vmatpush1.msra.mxu0 0.0
  %234 = vmatprep.subr.mxu0 0.0
  %235 = vmatpush1.msra.mxu0 0.0
  %236 = vmatprep.subr.mxu0 0.0
  %237 = vmatpush1.msra.mxu0 0.0
  %238 = vmatprep.subr.mxu0 0.0
  %239 = vmatpush1.msra.mxu0 0.0
  %240 = vmatprep.subr.mxu0 0.0
  %241 = vmatpush1.msra.mxu0 0.0
  %242 = vmatprep.subr.mxu0 0.0
  %243 = vmatpush1.msra.mxu0 0.0
  %244 = vmatprep.subr.mxu0 0.0
  %245 = vmatpush1.msra.mxu0 0.0
  %246 = vmatprep.subr.mxu0 0.0
  %247 = vmatpush1.msra.mxu0 0.0
  %248 = vmatprep.subr.mxu0 0.0
  %249 = vmatpush1.msra.mxu0 0.0
  %250 = vmatprep.subr.mxu0 0.0
  %251 = vmatpush1.msra.mxu0 0.0
  %252 = vmatprep.subr.mxu0 0.0
  %253 = vmatpush1.msra.mxu0 0.0
  %254 = vmatprep.subr.mxu0 0.0
  %255 = vmatpush1.msra.mxu0 0.0
  %256 = vmatprep.mubr.f32.mxu0 0.0
  %257 = vmatmul.mubr.f32.gmra.mrb[0].mxu0 %v190
  %v258 = vpop.f32.mrb[0].mxu0
  %v259 = vadd.f32 0.0, %v258
  %v260 = vpop.f32.mrb[0].mxu0
  %261 = vdwg.mxu0
  %v262 = vadd.f32 %v184, %v259
  %v263 = vmul.f32 %v262, 0.5
  %v264 = vtanh.pop %v263
  %v265 = vmul.f32 %v264, 0.5
  %v266 = vadd.f32 %v265, 0.5
  %v267 = vtanh.pop %v262
  %269 = vrot.lane.b32.xlu0 %v183, 32
  %v270 = vpop.permute.xlu0 %269
  %v272 = vmul.f32 %v266, %v270
  %274 = vrot.lane.b32.xlu0 %v267, 64
  %v275 = vpop.permute.xlu0 %274
  %v277 = vmul.f32 %v266, %v275
  %279 = vrot.lane.b32.xlu0 %v277, 32
  %v280 = vpop.permute.xlu0 %279
  %v282 = vadd.f32 %v272, %v280
  %v283 = vtanh.pop %v282
  %285 = vrot.lane.b32.xlu0 %v283, 64
  %v286 = vpop.permute.xlu0 %285
  %v288 = vmul.f32 %v266, %v286
  %v290 = vcombine.high %v288, %v288
  %v292 = vunpack.c.l.s4 1966171168
  %v293 = vunpack.c.0.s8 %v292
  %v294 = vlaneseq
  %v295 = vshrl.u32 %v294, 7
  %v296 = vsub.s32 %v293, %v295
  %v297 = vrot.slane %v288, %v296
  %v299 = vunpack.c.l.s4 1966171168
  %v300 = vunpack.c.0.s8 %v299
  %v301 = vlaneseq
  %v302 = vshrl.u32 %v301, 7
  %v303 = vsub.s32 %v300, %v302
  %v304 = vrot.slane %v290, %v303
  %v305 = vcombine.high %v297, %v297
  %v306 = vcombine.high %v304, %v304
  %v308 = vunpack.c.l.s4 1966171168
  %v309 = vunpack.c.0.s8 %v308
  %v310 = vlaneseq
  %v311 = vshrl.u32 %v310, 7
  %v312 = vsub.s32 %v309, %v311
  %v313 = vrot.slane %v297, %v312
  %v315 = vunpack.c.l.s4 1966171168
  %v316 = vunpack.c.0.s8 %v315
  %v317 = vlaneseq
  %v318 = vshrl.u32 %v317, 7
  %v319 = vsub.s32 %v316, %v318
  %v320 = vrot.slane %v304, %v319
  %v322 = vunpack.c.l.s4 1966171168
  %v323 = vunpack.c.0.s8 %v322
  %v324 = vlaneseq
  %v325 = vshrl.u32 %v324, 7
  %v326 = vsub.s32 %v323, %v325
  %v327 = vrot.slane %v305, %v326
  %v329 = vunpack.c.l.s4 1966171168
  %v330 = vunpack.c.0.s8 %v329
  %v331 = vlaneseq
  %v332 = vshrl.u32 %v331, 7
  %v333 = vsub.s32 %v330, %v332
  %v334 = vrot.slane %v306, %v333
  %v335 = vcombine.high %v313, %v313
  %v336 = vcombine.high %v320, %v320
  %v337 = vcombine.high %v327, %v327
  %v338 = vcombine.high %v334, %v334
  %v339 = vlaneseq
  %v340 = vshrl.u32 %v339, 7
  %v341 = vsub.s32 0, %v340
  %v342 = vrot.slane %v313, %v341
  %v343 = vlaneseq
  %v344 = vshrl.u32 %v343, 7
  %v345 = vsub.s32 0, %v344
  %v346 = vrot.slane %v327, %v345
  %v347 = vlaneseq
  %v348 = vshrl.u32 %v347, 7
  %v349 = vsub.s32 0, %v348
  %v350 = vrot.slane %v335, %v349
  %v351 = vlaneseq
  %v352 = vshrl.u32 %v351, 7
  %v353 = vsub.s32 0, %v352
  %v354 = vrot.slane %v337, %v353
  %v355 = vlaneseq
  %v356 = vshrl.u32 %v355, 7
  %v357 = vsub.s32 0, %v356
  %v358 = vrot.slane %v320, %v357
  %v359 = vlaneseq
  %v360 = vshrl.u32 %v359, 7
  %v361 = vsub.s32 0, %v360
  %v362 = vrot.slane %v334, %v361
  %v363 = vlaneseq
  %v364 = vshrl.u32 %v363, 7
  %v365 = vsub.s32 0, %v364
  %v366 = vrot.slane %v336, %v365
  %v367 = vlaneseq
  %v368 = vshrl.u32 %v367, 7
  %v369 = vsub.s32 0, %v368
  %v370 = vrot.slane %v338, %v369
  %371 = vrot.lane.b32.xlu0 %v342, 32
  %v372 = vpop.permute.xlu0 %371
  %373 = vrot.lane.b32.xlu0 %v346, 32
  %v374 = vpop.permute.xlu0 %373
  %375 = vrot.lane.b32.xlu0 %v350, 32
  %v376 = vpop.permute.xlu0 %375
  %377 = vrot.lane.b32.xlu0 %v354, 32
  %v378 = vpop.permute.xlu0 %377
  %379 = vrot.lane.b32.xlu0 %v358, 32
  %v380 = vpop.permute.xlu0 %379
  %381 = vrot.lane.b32.xlu0 %v362, 32
  %v382 = vpop.permute.xlu0 %381
  %383 = vrot.lane.b32.xlu0 %v366, 32
  %v384 = vpop.permute.xlu0 %383
  %385 = vrot.lane.b32.xlu0 %v370, 32
  %v386 = vpop.permute.xlu0 %385
  %vm395 = vcmask 253952
  %396 = vst.msk [vmem:[%s4] sm:$0x1] %vm395, %v372
  %397 = vst.msk [vmem:[%s4 + $0x8] sm:$0x1] %vm395, %v374
  %398 = vst.msk [vmem:[%s4 + $0x10] sm:$0x1] %vm395, %v376
  %399 = vst.msk [vmem:[%s4 + $0x18] sm:$0x1] %vm395, %v378
  %400 = vst.msk [vmem:[%s4 + $0x20] sm:$0x1] %vm395, %v380
  %401 = vst.msk [vmem:[%s4 + $0x28] sm:$0x1] %vm395, %v382
  %402 = vst.msk [vmem:[%s4 + $0x30] sm:$0x1] %vm395, %v384
  %403 = vst.msk [vmem:[%s4 + $0x38] sm:$0x1] %vm395, %v386
  %s404 = scalar_lea.vmem [#allocation3], 8
  %v405 = vld [vmem:[%s404] sm:$0xff]
  %v406 = vld [vmem:[%s2] sm:$0xff]
  %v407 = vld [vmem:[%s2 + $0x8] sm:$0xff]
  %v408 = vld [vmem:[%s2 + $0x10] sm:$0xff]
  %v409 = vld [vmem:[%s2 + $0x18] sm:$0xff]
  %410 = vrot.lane.b32.xlu0 %v288, 32
  %v411 = vpop.permute.xlu0 %410
  %v412 = vsel %vm43, %v411, 0
  %414 = vmatprep.subr.mxu0 0.0
  %415 = vmatpush1.msra.mxu0 %v406
  %416 = vmatprep.subr.mxu0 0.0
  %417 = vmatpush1.msra.mxu0 %v407
  %418 = vmatprep.subr.mxu0 0.0
  %419 = vmatpush1.msra.mxu0 %v408
  %420 = vmatprep.subr.mxu0 0.0
  %421 = vmatpush1.msra.mxu0 %v409
  %422 = vmatprep.subr.mxu0 0.0
  %423 = vmatpush1.msra.mxu0 0.0
  %424 = vmatprep.subr.mxu0 0.0
  %425 = vmatpush1.msra.mxu0 0.0
  %426 = vmatprep.subr.mxu0 0.0
  %427 = vmatpush1.msra.mxu0 0.0
  %428 = vmatprep.subr.mxu0 0.0
  %429 = vmatpush1.msra.mxu0 0.0
  %430 = vmatprep.subr.mxu0 0.0
  %431 = vmatpush1.msra.mxu0 0.0
  %432 = vmatprep.subr.mxu0 0.0
  %433 = vmatpush1.msra.mxu0 0.0
  %434 = vmatprep.subr.mxu0 0.0
  %435 = vmatpush1.msra.mxu0 0.0
  %436 = vmatprep.subr.mxu0 0.0
  %437 = vmatpush1.msra.mxu0 0.0
  %438 = vmatprep.subr.mxu0 0.0
  %439 = vmatpush1.msra.mxu0 0.0
  %440 = vmatprep.subr.mxu0 0.0
  %441 = vmatpush1.msra.mxu0 0.0
  %442 = vmatprep.subr.mxu0 0.0
  %443 = vmatpush1.msra.mxu0 0.0
  %444 = vmatprep.subr.mxu0 0.0
  %445 = vmatpush1.msra.mxu0 0.0
  %446 = vmatprep.subr.mxu0 0.0
  %447 = vmatpush1.msra.mxu0 0.0
  %448 = vmatprep.subr.mxu0 0.0
  %449 = vmatpush1.msra.mxu0 0.0
  %450 = vmatprep.subr.mxu0 0.0
  %451 = vmatpush1.msra.mxu0 0.0
  %452 = vmatprep.subr.mxu0 0.0
  %453 = vmatpush1.msra.mxu0 0.0
  %454 = vmatprep.subr.mxu0 0.0
  %455 = vmatpush1.msra.mxu0 0.0
  %456 = vmatprep.subr.mxu0 0.0
  %457 = vmatpush1.msra.mxu0 0.0
  %458 = vmatprep.subr.mxu0 0.0
  %459 = vmatpush1.msra.mxu0 0.0
  %460 = vmatprep.subr.mxu0 0.0
  %461 = vmatpush1.msra.mxu0 0.0
  %462 = vmatprep.subr.mxu0 0.0
  %463 = vmatpush1.msra.mxu0 0.0
  %464 = vmatprep.subr.mxu0 0.0
  %465 = vmatpush1.msra.mxu0 0.0
  %466 = vmatprep.subr.mxu0 0.0
  %467 = vmatpush1.msra.mxu0 0.0
  %468 = vmatprep.subr.mxu0 0.0
  %469 = vmatpush1.msra.mxu0 0.0
  %470 = vmatprep.subr.mxu0 0.0
  %471 = vmatpush1.msra.mxu0 0.0
  %472 = vmatprep.subr.mxu0 0.0
  %473 = vmatpush1.msra.mxu0 0.0
  %474 = vmatprep.subr.mxu0 0.0
  %475 = vmatpush1.msra.mxu0 0.0
  %476 = vmatprep.subr.mxu0 0.0
  %477 = vmatpush1.msra.mxu0 0.0
  %478 = vmatprep.mubr.f32.mxu0 0.0
  %479 = vmatmul.mubr.f32.gmra.mrb[0].mxu0 %v412
  %v480 = vpop.f32.mrb[0].mxu0
  %v481 = vadd.f32 0.0, %v480
  %v482 = vpop.f32.mrb[0].mxu0
  %483 = vdwg.mxu0
  %v484 = vadd.f32 %v405, %v481
  %v485 = vmul.f32 %v484, 0.5
  %v486 = vtanh.pop %v485
  %v487 = vmul.f32 %v486, 0.5
  %v488 = vadd.f32 %v487, 0.5
  %v489 = vtanh.pop %v484
  %v490 = vmul.f32 %v488, %v282
  %492 = vrot.lane.b32.xlu0 %v489, 64
  %v493 = vpop.permute.xlu0 %492
  %v495 = vmul.f32 %v488, %v493
  %497 = vrot.lane.b32.xlu0 %v495, 32
  %v498 = vpop.permute.xlu0 %497
  %v500 = vadd.f32 %v490, %v498
  %v501 = vtanh.pop %v500
  %503 = vrot.lane.b32.xlu0 %v501, 64
  %v504 = vpop.permute.xlu0 %503
  %v506 = vmul.f32 %v488, %v504
  %v508 = vcombine.high %v506, %v506
  %v510 = vunpack.c.l.s4 1966171168
  %v511 = vunpack.c.0.s8 %v510
  %v512 = vlaneseq
  %v513 = vshrl.u32 %v512, 7
  %v514 = vsub.s32 %v511, %v513
  %v515 = vrot.slane %v506, %v514
  %v517 = vunpack.c.l.s4 1966171168
  %v518 = vunpack.c.0.s8 %v517
  %v519 = vlaneseq
  %v520 = vshrl.u32 %v519, 7
  %v521 = vsub.s32 %v518, %v520
  %v522 = vrot.slane %v508, %v521
  %v523 = vcombine.high %v515, %v515
  %v524 = vcombine.high %v522, %v522
  %v526 = vunpack.c.l.s4 1966171168
  %v527 = vunpack.c.0.s8 %v526
  %v528 = vlaneseq
  %v529 = vshrl.u32 %v528, 7
  %v530 = vsub.s32 %v527, %v529
  %v531 = vrot.slane %v515, %v530
  %v533 = vunpack.c.l.s4 1966171168
  %v534 = vunpack.c.0.s8 %v533
  %v535 = vlaneseq
  %v536 = vshrl.u32 %v535, 7
  %v537 = vsub.s32 %v534, %v536
  %v538 = vrot.slane %v522, %v537
  %v540 = vunpack.c.l.s4 1966171168
  %v541 = vunpack.c.0.s8 %v540
  %v542 = vlaneseq
  %v543 = vshrl.u32 %v542, 7
  %v544 = vsub.s32 %v541, %v543
  %v545 = vrot.slane %v523, %v544
  %v547 = vunpack.c.l.s4 1966171168
  %v548 = vunpack.c.0.s8 %v547
  %v549 = vlaneseq
  %v550 = vshrl.u32 %v549, 7
  %v551 = vsub.s32 %v548, %v550
  %v552 = vrot.slane %v524, %v551
  %v553 = vcombine.high %v531, %v531
  %v554 = vcombine.high %v538, %v538
  %v555 = vcombine.high %v545, %v545
  %v556 = vcombine.high %v552, %v552
  %v557 = vlaneseq
  %v558 = vshrl.u32 %v557, 7
  %v559 = vsub.s32 0, %v558
  %v560 = vrot.slane %v531, %v559
  %v561 = vlaneseq
  %v562 = vshrl.u32 %v561, 7
  %v563 = vsub.s32 0, %v562
  %v564 = vrot.slane %v545, %v563
  %v565 = vlaneseq
  %v566 = vshrl.u32 %v565, 7
  %v567 = vsub.s32 0, %v566
  %v568 = vrot.slane %v553, %v567
  %v569 = vlaneseq
  %v570 = vshrl.u32 %v569, 7
  %v571 = vsub.s32 0, %v570
  %v572 = vrot.slane %v555, %v571
  %v573 = vlaneseq
  %v574 = vshrl.u32 %v573, 7
  %v575 = vsub.s32 0, %v574
  %v576 = vrot.slane %v538, %v575
  %v577 = vlaneseq
  %v578 = vshrl.u32 %v577, 7
  %v579 = vsub.s32 0, %v578
  %v580 = vrot.slane %v552, %v579
  %v581 = vlaneseq
  %v582 = vshrl.u32 %v581, 7
  %v583 = vsub.s32 0, %v582
  %v584 = vrot.slane %v554, %v583
  %v585 = vlaneseq
  %v586 = vshrl.u32 %v585, 7
  %v587 = vsub.s32 0, %v586
  %v588 = vrot.slane %v556, %v587
  %589 = vrot.lane.b32.xlu0 %v560, 32
  %v590 = vpop.permute.xlu0 %589
  %591 = vrot.lane.b32.xlu0 %v564, 32
  %v592 = vpop.permute.xlu0 %591
  %593 = vrot.lane.b32.xlu0 %v568, 32
  %v594 = vpop.permute.xlu0 %593
  %595 = vrot.lane.b32.xlu0 %v572, 32
  %v596 = vpop.permute.xlu0 %595
  %597 = vrot.lane.b32.xlu0 %v576, 32
  %v598 = vpop.permute.xlu0 %597
  %599 = vrot.lane.b32.xlu0 %v580, 32
  %v600 = vpop.permute.xlu0 %599
  %601 = vrot.lane.b32.xlu0 %v584, 32
  %v602 = vpop.permute.xlu0 %601
  %603 = vrot.lane.b32.xlu0 %v588, 32
  %v604 = vpop.permute.xlu0 %603
  %613 = vst.msk [vmem:[%s4 + $0x1] sm:$0x1] %vm395, %v590
  %614 = vst.msk [vmem:[%s4 + $0x9] sm:$0x1] %vm395, %v592
  %615 = vst.msk [vmem:[%s4 + $0x11] sm:$0x1] %vm395, %v594
  %616 = vst.msk [vmem:[%s4 + $0x19] sm:$0x1] %vm395, %v596
  %617 = vst.msk [vmem:[%s4 + $0x21] sm:$0x1] %vm395, %v598
  %618 = vst.msk [vmem:[%s4 + $0x29] sm:$0x1] %vm395, %v600
  %619 = vst.msk [vmem:[%s4 + $0x31] sm:$0x1] %vm395, %v602
  %620 = vst.msk [vmem:[%s4 + $0x39] sm:$0x1] %vm395, %v604
  %s621 = scalar_lea.vmem [#allocation3], 16
  %v622 = vld [vmem:[%s621] sm:$0xff]
  %v623 = vld [vmem:[%s2] sm:$0xff]
  %v624 = vld [vmem:[%s2 + $0x8] sm:$0xff]
  %v625 = vld [vmem:[%s2 + $0x10] sm:$0xff]
  %v626 = vld [vmem:[%s2 + $0x18] sm:$0xff]
  %627 = vrot.lane.b32.xlu0 %v506, 32
  %v628 = vpop.permute.xlu0 %627
  %v629 = vsel %vm43, %v628, 0
  %631 = vmatprep.subr.mxu0 0.0
  %632 = vmatpush1.msra.mxu0 %v623
  %633 = vmatprep.subr.mxu0 0.0
  %634 = vmatpush1.msra.mxu0 %v624
  %635 = vmatprep.subr.mxu0 0.0
  %636 = vmatpush1.msra.mxu0 %v625
  %637 = vmatprep.subr.mxu0 0.0
  %638 = vmatpush1.msra.mxu0 %v626
  %639 = vmatprep.subr.mxu0 0.0
  %640 = vmatpush1.msra.mxu0 0.0
  %641 = vmatprep.subr.mxu0 0.0
  %642 = vmatpush1.msra.mxu0 0.0
  %643 = vmatprep.subr.mxu0 0.0
  %644 = vmatpush1.msra.mxu0 0.0
  %645 = vmatprep.subr.mxu0 0.0
  %646 = vmatpush1.msra.mxu0 0.0
  %647 = vmatprep.subr.mxu0 0.0
  %648 = vmatpush1.msra.mxu0 0.0
  %649 = vmatprep.subr.mxu0 0.0
  %650 = vmatpush1.msra.mxu0 0.0
  %651 = vmatprep.subr.mxu0 0.0
  %652 = vmatpush1.msra.mxu0 0.0
  %653 = vmatprep.subr.mxu0 0.0
  %654 = vmatpush1.msra.mxu0 0.0
  %655 = vmatprep.subr.mxu0 0.0
  %656 = vmatpush1.msra.mxu0 0.0
  %657 = vmatprep.subr.mxu0 0.0
  %658 = vmatpush1.msra.mxu0 0.0
  %659 = vmatprep.subr.mxu0 0.0
  %660 = vmatpush1.msra.mxu0 0.0
  %661 = vmatprep.subr.mxu0 0.0
  %662 = vmatpush1.msra.mxu0 0.0
  %663 = vmatprep.subr.mxu0 0.0
  %664 = vmatpush1.msra.mxu0 0.0
  %665 = vmatprep.subr.mxu0 0.0
  %666 = vmatpush1.msra.mxu0 0.0
  %667 = vmatprep.subr.mxu0 0.0
  %668 = vmatpush1.msra.mxu0 0.0
  %669 = vmatprep.subr.mxu0 0.0
  %670 = vmatpush1.msra.mxu0 0.0
  %671 = vmatprep.subr.mxu0 0.0
  %672 = vmatpush1.msra.mxu0 0.0
  %673 = vmatprep.subr.mxu0 0.0
  %674 = vmatpush1.msra.mxu0 0.0
  %675 = vmatprep.subr.mxu0 0.0
  %676 = vmatpush1.msra.mxu0 0.0
  %677 = vmatprep.subr.mxu0 0.0
  %678 = vmatpush1.msra.mxu0 0.0
  %679 = vmatprep.subr.mxu0 0.0
  %680 = vmatpush1.msra.mxu0 0.0
  %681 = vmatprep.subr.mxu0 0.0
  %682 = vmatpush1.msra.mxu0 0.0
  %683 = vmatprep.subr.mxu0 0.0
  %684 = vmatpush1.msra.mxu0 0.0
  %685 = vmatprep.subr.mxu0 0.0
  %686 = vmatpush1.msra.mxu0 0.0
  %687 = vmatprep.subr.mxu0 0.0
  %688 = vmatpush1.msra.mxu0 0.0
  %689 = vmatprep.subr.mxu0 0.0
  %690 = vmatpush1.msra.mxu0 0.0
  %691 = vmatprep.subr.mxu0 0.0
  %692 = vmatpush1.msra.mxu0 0.0
  %693 = vmatprep.subr.mxu0 0.0
  %694 = vmatpush1.msra.mxu0 0.0
  %695 = vmatprep.mubr.f32.mxu0 0.0
  %696 = vmatmul.mubr.f32.gmra.mrb[0].mxu0 %v629
  %v697 = vpop.f32.mrb[0].mxu0
  %v698 = vadd.f32 0.0, %v697
  %v699 = vpop.f32.mrb[0].mxu0
  %700 = vdwg.mxu0
  %v701 = vadd.f32 %v622, %v698
  %v702 = vmul.f32 %v701, 0.5
  %v703 = vtanh.pop %v702
  %v704 = vmul.f32 %v703, 0.5
  %v705 = vadd.f32 %v704, 0.5
  %v706 = vtanh.pop %v701
  %v707 = vmul.f32 %v705, %v500
  %709 = vrot.lane.b32.xlu0 %v706, 64
  %v710 = vpop.permute.xlu0 %709
  %v712 = vmul.f32 %v705, %v710
  %714 = vrot.lane.b32.xlu0 %v712, 32
  %v715 = vpop.permute.xlu0 %714
  %v717 = vadd.f32 %v707, %v715
  %v718 = vtanh.pop %v717
  %720 = vrot.lane.b32.xlu0 %v718, 64
  %v721 = vpop.permute.xlu0 %720
  %v723 = vmul.f32 %v705, %v721
  %v725 = vcombine.high %v723, %v723
  %v727 = vunpack.c.l.s4 1966171168
  %v728 = vunpack.c.0.s8 %v727
  %v729 = vlaneseq
  %v730 = vshrl.u32 %v729, 7
  %v731 = vsub.s32 %v728, %v730
  %v732 = vrot.slane %v723, %v731
  %v734 = vunpack.c.l.s4 1966171168
  %v735 = vunpack.c.0.s8 %v734
  %v736 = vlaneseq
  %v737 = vshrl.u32 %v736, 7
  %v738 = vsub.s32 %v735, %v737
  %v739 = vrot.slane %v725, %v738
  %v740 = vcombine.high %v732, %v732
  %v741 = vcombine.high %v739, %v739
  %v743 = vunpack.c.l.s4 1966171168
  %v744 = vunpack.c.0.s8 %v743
  %v745 = vlaneseq
  %v746 = vshrl.u32 %v745, 7
  %v747 = vsub.s32 %v744, %v746
  %v748 = vrot.slane %v732, %v747
  %v750 = vunpack.c.l.s4 1966171168
  %v751 = vunpack.c.0.s8 %v750
  %v752 = vlaneseq
  %v753 = vshrl.u32 %v752, 7
  %v754 = vsub.s32 %v751, %v753
  %v755 = vrot.slane %v739, %v754
  %v757 = vunpack.c.l.s4 1966171168
  %v758 = vunpack.c.0.s8 %v757
  %v759 = vlaneseq
  %v760 = vshrl.u32 %v759, 7
  %v761 = vsub.s32 %v758, %v760
  %v762 = vrot.slane %v740, %v761
  %v764 = vunpack.c.l.s4 1966171168
  %v765 = vunpack.c.0.s8 %v764
  %v766 = vlaneseq
  %v767 = vshrl.u32 %v766, 7
  %v768 = vsub.s32 %v765, %v767
  %v769 = vrot.slane %v741, %v768
  %v770 = vcombine.high %v748, %v748
  %v771 = vcombine.high %v755, %v755
  %v772 = vcombine.high %v762, %v762
  %v773 = vcombine.high %v769, %v769
  %v774 = vlaneseq
  %v775 = vshrl.u32 %v774, 7
  %v776 = vsub.s32 0, %v775
  %v777 = vrot.slane %v748, %v776
  %v778 = vlaneseq
  %v779 = vshrl.u32 %v778, 7
  %v780 = vsub.s32 0, %v779
  %v781 = vrot.slane %v762, %v780
  %v782 = vlaneseq
  %v783 = vshrl.u32 %v782, 7
  %v784 = vsub.s32 0, %v783
  %v785 = vrot.slane %v770, %v784
  %v786 = vlaneseq
  %v787 = vshrl.u32 %v786, 7
  %v788 = vsub.s32 0, %v787
  %v789 = vrot.slane %v772, %v788
  %v790 = vlaneseq
  %v791 = vshrl.u32 %v790, 7
  %v792 = vsub.s32 0, %v791
  %v793 = vrot.slane %v755, %v792
  %v794 = vlaneseq
  %v795 = vshrl.u32 %v794, 7
  %v796 = vsub.s32 0, %v795
  %v797 = vrot.slane %v769, %v796
  %v798 = vlaneseq
  %v799 = vshrl.u32 %v798, 7
  %v800 = vsub.s32 0, %v799
  %v801 = vrot.slane %v771, %v800
  %v802 = vlaneseq
  %v803 = vshrl.u32 %v802, 7
  %v804 = vsub.s32 0, %v803
  %v805 = vrot.slane %v773, %v804
  %806 = vrot.lane.b32.xlu0 %v777, 32
  %v807 = vpop.permute.xlu0 %806
  %808 = vrot.lane.b32.xlu0 %v781, 32
  %v809 = vpop.permute.xlu0 %808
  %810 = vrot.lane.b32.xlu0 %v785, 32
  %v811 = vpop.permute.xlu0 %810
  %812 = vrot.lane.b32.xlu0 %v789, 32
  %v813 = vpop.permute.xlu0 %812
  %814 = vrot.lane.b32.xlu0 %v793, 32
  %v815 = vpop.permute.xlu0 %814
  %816 = vrot.lane.b32.xlu0 %v797, 32
  %v817 = vpop.permute.xlu0 %816
  %818 = vrot.lane.b32.xlu0 %v801, 32
  %v819 = vpop.permute.xlu0 %818
  %820 = vrot.lane.b32.xlu0 %v805, 32
  %v821 = vpop.permute.xlu0 %820
  %830 = vst.msk [vmem:[%s4 + $0x2] sm:$0x1] %vm395, %v807
  %831 = vst.msk [vmem:[%s4 + $0xa] sm:$0x1] %vm395, %v809
  %832 = vst.msk [vmem:[%s4 + $0x12] sm:$0x1] %vm395, %v811
  %833 = vst.msk [vmem:[%s4 + $0x1a] sm:$0x1] %vm395, %v813
  %834 = vst.msk [vmem:[%s4 + $0x22] sm:$0x1] %vm395, %v815
  %835 = vst.msk [vmem:[%s4 + $0x2a] sm:$0x1] %vm395, %v817
  %836 = vst.msk [vmem:[%s4 + $0x32] sm:$0x1] %vm395, %v819
  %837 = vst.msk [vmem:[%s4 + $0x3a] sm:$0x1] %vm395, %v821
  %s838 = scalar_lea.vmem [#allocation3], 24
  %v839 = vld [vmem:[%s838] sm:$0xff]
  %v840 = vld [vmem:[%s2] sm:$0xff]
  %v841 = vld [vmem:[%s2 + $0x8] sm:$0xff]
  %v842 = vld [vmem:[%s2 + $0x10] sm:$0xff]
  %v843 = vld [vmem:[%s2 + $0x18] sm:$0xff]
  %844 = vrot.lane.b32.xlu0 %v723, 32
  %v845 = vpop.permute.xlu0 %844
  %v846 = vsel %vm43, %v845, 0
  %848 = vmatprep.subr.mxu0 0.0
  %849 = vmatpush1.msra.mxu0 %v840
  %850 = vmatprep.subr.mxu0 0.0
  %851 = vmatpush1.msra.mxu0 %v841
  %852 = vmatprep.subr.mxu0 0.0
  %853 = vmatpush1.msra.mxu0 %v842
  %854 = vmatprep.subr.mxu0 0.0
  %855 = vmatpush1.msra.mxu0 %v843
  %856 = vmatprep.subr.mxu0 0.0
  %857 = vmatpush1.msra.mxu0 0.0
  %858 = vmatprep.subr.mxu0 0.0
  %859 = vmatpush1.msra.mxu0 0.0
  %860 = vmatprep.subr.mxu0 0.0
  %861 = vmatpush1.msra.mxu0 0.0
  %862 = vmatprep.subr.mxu0 0.0
  %863 = vmatpush1.msra.mxu0 0.0
  %864 = vmatprep.subr.mxu0 0.0
  %865 = vmatpush1.msra.mxu0 0.0
  %866 = vmatprep.subr.mxu0 0.0
  %867 = vmatpush1.msra.mxu0 0.0
  %868 = vmatprep.subr.mxu0 0.0
  %869 = vmatpush1.msra.mxu0 0.0
  %870 = vmatprep.subr.mxu0 0.0
  %871 = vmatpush1.msra.mxu0 0.0
  %872 = vmatprep.subr.mxu0 0.0
  %873 = vmatpush1.msra.mxu0 0.0
  %874 = vmatprep.subr.mxu0 0.0
  %875 = vmatpush1.msra.mxu0 0.0
  %876 = vmatprep.subr.mxu0 0.0
  %877 = vmatpush1.msra.mxu0 0.0
  %878 = vmatprep.subr.mxu0 0.0
  %879 = vmatpush1.msra.mxu0 0.0
  %880 = vmatprep.subr.mxu0 0.0
  %881 = vmatpush1.msra.mxu0 0.0
  %882 = vmatprep.subr.mxu0 0.0
  %883 = vmatpush1.msra.mxu0 0.0
  %884 = vmatprep.subr.mxu0 0.0
  %885 = vmatpush1.msra.mxu0 0.0
  %886 = vmatprep.subr.mxu0 0.0
  %887 = vmatpush1.msra.mxu0 0.0
  %888 = vmatprep.subr.mxu0 0.0
  %889 = vmatpush1.msra.mxu0 0.0
  %890 = vmatprep.subr.mxu0 0.0
  %891 = vmatpush1.msra.mxu0 0.0
  %892 = vmatprep.subr.mxu0 0.0
  %893 = vmatpush1.msra.mxu0 0.0
  %894 = vmatprep.subr.mxu0 0.0
  %895 = vmatpush1.msra.mxu0 0.0
  %896 = vmatprep.subr.mxu0 0.0
  %897 = vmatpush1.msra.mxu0 0.0
  %898 = vmatprep.subr.mxu0 0.0
  %899 = vmatpush1.msra.mxu0 0.0
  %900 = vmatprep.subr.mxu0 0.0
  %901 = vmatpush1.msra.mxu0 0.0
  %902 = vmatprep.subr.mxu0 0.0
  %903 = vmatpush1.msra.mxu0 0.0
  %904 = vmatprep.subr.mxu0 0.0
  %905 = vmatpush1.msra.mxu0 0.0
  %906 = vmatprep.subr.mxu0 0.0
  %907 = vmatpush1.msra.mxu0 0.0
  %908 = vmatprep.subr.mxu0 0.0
  %909 = vmatpush1.msra.mxu0 0.0
  %910 = vmatprep.subr.mxu0 0.0
  %911 = vmatpush1.msra.mxu0 0.0
  %912 = vmatprep.mubr.f32.mxu0 0.0
  %913 = vmatmul.mubr.f32.gmra.mrb[0].mxu0 %v846
  %v914 = vpop.f32.mrb[0].mxu0
  %v915 = vadd.f32 0.0, %v914
  %v916 = vpop.f32.mrb[0].mxu0
  %917 = vdwg.mxu0
  %v918 = vadd.f32 %v839, %v915
  %v919 = vmul.f32 %v918, 0.5
  %v920 = vtanh.pop %v919
  %v921 = vmul.f32 %v920, 0.5
  %v922 = vadd.f32 %v921, 0.5
  %v923 = vtanh.pop %v918
  %v924 = vmul.f32 %v922, %v717
  %926 = vrot.lane.b32.xlu0 %v923, 64
  %v927 = vpop.permute.xlu0 %926
  %v929 = vmul.f32 %v922, %v927
  %931 = vrot.lane.b32.xlu0 %v929, 32
  %v932 = vpop.permute.xlu0 %931
  %v934 = vadd.f32 %v924, %v932
  %v935 = vtanh.pop %v934
  %937 = vrot.lane.b32.xlu0 %v935, 64
  %v938 = vpop.permute.xlu0 %937
  %v940 = vmul.f32 %v922, %v938
  %v942 = vcombine.high %v940, %v940
  %v944 = vunpack.c.l.s4 1966171168
  %v945 = vunpack.c.0.s8 %v944
  %v946 = vlaneseq
  %v947 = vshrl.u32 %v946, 7
  %v948 = vsub.s32 %v945, %v947
  %v949 = vrot.slane %v940, %v948
  %v951 = vunpack.c.l.s4 1966171168
  %v952 = vunpack.c.0.s8 %v951
  %v953 = vlaneseq
  %v954 = vshrl.u32 %v953, 7
  %v955 = vsub.s32 %v952, %v954
  %v956 = vrot.slane %v942, %v955
  %v957 = vcombine.high %v949, %v949
  %v958 = vcombine.high %v956, %v956
  %v960 = vunpack.c.l.s4 1966171168
  %v961 = vunpack.c.0.s8 %v960
  %v962 = vlaneseq
  %v963 = vshrl.u32 %v962, 7
  %v964 = vsub.s32 %v961, %v963
  %v965 = vrot.slane %v949, %v964
  %v967 = vunpack.c.l.s4 1966171168
  %v968 = vunpack.c.0.s8 %v967
  %v969 = vlaneseq
  %v970 = vshrl.u32 %v969, 7
  %v971 = vsub.s32 %v968, %v970
  %v972 = vrot.slane %v956, %v971
  %v974 = vunpack.c.l.s4 1966171168
  %v975 = vunpack.c.0.s8 %v974
  %v976 = vlaneseq
  %v977 = vshrl.u32 %v976, 7
  %v978 = vsub.s32 %v975, %v977
  %v979 = vrot.slane %v957, %v978
  %v981 = vunpack.c.l.s4 1966171168
  %v982 = vunpack.c.0.s8 %v981
  %v983 = vlaneseq
  %v984 = vshrl.u32 %v983, 7
  %v985 = vsub.s32 %v982, %v984
  %v986 = vrot.slane %v958, %v985
  %v987 = vcombine.high %v965, %v965
  %v988 = vcombine.high %v972, %v972
  %v989 = vcombine.high %v979, %v979
  %v990 = vcombine.high %v986, %v986
  %v991 = vlaneseq
  %v992 = vshrl.u32 %v991, 7
  %v993 = vsub.s32 0, %v992
  %v994 = vrot.slane %v965, %v993
  %v995 = vlaneseq
  %v996 = vshrl.u32 %v995, 7
  %v997 = vsub.s32 0, %v996
  %v998 = vrot.slane %v979, %v997
  %v999 = vlaneseq
  %v1000 = vshrl.u32 %v999, 7
  %v1001 = vsub.s32 0, %v1000
  %v1002 = vrot.slane %v987, %v1001
  %v1003 = vlaneseq
  %v1004 = vshrl.u32 %v1003, 7
  %v1005 = vsub.s32 0, %v1004
  %v1006 = vrot.slane %v989, %v1005
  %v1007 = vlaneseq
  %v1008 = vshrl.u32 %v1007, 7
  %v1009 = vsub.s32 0, %v1008
  %v1010 = vrot.slane %v972, %v1009
  %v1011 = vlaneseq
  %v1012 = vshrl.u32 %v1011, 7
  %v1013 = vsub.s32 0, %v1012
  %v1014 = vrot.slane %v986, %v1013
  %v1015 = vlaneseq
  %v1016 = vshrl.u32 %v1015, 7
  %v1017 = vsub.s32 0, %v1016
  %v1018 = vrot.slane %v988, %v1017
  %v1019 = vlaneseq
  %v1020 = vshrl.u32 %v1019, 7
  %v1021 = vsub.s32 0, %v1020
  %v1022 = vrot.slane %v990, %v1021
  %1023 = vrot.lane.b32.xlu0 %v994, 32
  %v1024 = vpop.permute.xlu0 %1023
  %1025 = vrot.lane.b32.xlu0 %v998, 32
  %v1026 = vpop.permute.xlu0 %1025
  %1027 = vrot.lane.b32.xlu0 %v1002, 32
  %v1028 = vpop.permute.xlu0 %1027
  %1029 = vrot.lane.b32.xlu0 %v1006, 32
  %v1030 = vpop.permute.xlu0 %1029
  %1031 = vrot.lane.b32.xlu0 %v1010, 32
  %v1032 = vpop.permute.xlu0 %1031
  %1033 = vrot.lane.b32.xlu0 %v1014, 32
  %v1034 = vpop.permute.xlu0 %1033
  %1035 = vrot.lane.b32.xlu0 %v1018, 32
  %v1036 = vpop.permute.xlu0 %1035
  %1037 = vrot.lane.b32.xlu0 %v1022, 32
  %v1038 = vpop.permute.xlu0 %1037
  %1047 = vst.msk [vmem:[%s4 + $0x3] sm:$0x1] %vm395, %v1024
  %1048 = vst.msk [vmem:[%s4 + $0xb] sm:$0x1] %vm395, %v1026
  %1049 = vst.msk [vmem:[%s4 + $0x13] sm:$0x1] %vm395, %v1028
  %1050 = vst.msk [vmem:[%s4 + $0x1b] sm:$0x1] %vm395, %v1030
  %1051 = vst.msk [vmem:[%s4 + $0x23] sm:$0x1] %vm395, %v1032
  %1052 = vst.msk [vmem:[%s4 + $0x2b] sm:$0x1] %vm395, %v1034
  %1053 = vst.msk [vmem:[%s4 + $0x33] sm:$0x1] %vm395, %v1036
  %1054 = vst.msk [vmem:[%s4 + $0x3b] sm:$0x1] %vm395, %v1038
  %s1055 = scalar_lea.vmem [#allocation3], 32
  %v1056 = vld [vmem:[%s1055] sm:$0xff]
  %v1057 = vld [vmem:[%s2] sm:$0xff]
  %v1058 = vld [vmem:[%s2 + $0x8] sm:$0xff]
  %v1059 = vld [vmem:[%s2 + $0x10] sm:$0xff]
  %v1060 = vld [vmem:[%s2 + $0x18] sm:$0xff]
  %1061 = vrot.lane.b32.xlu0 %v940, 32
  %v1062 = vpop.permute.xlu0 %1061
  %v1063 = vsel %vm43, %v1062, 0
  %1065 = vmatprep.subr.mxu0 0.0
  %1066 = vmatpush1.msra.mxu0 %v1057
  %1067 = vmatprep.subr.mxu0 0.0
  %1068 = vmatpush1.msra.mxu0 %v1058
  %1069 = vmatprep.subr.mxu0 0.0
  %1070 = vmatpush1.msra.mxu0 %v1059
  %1071 = vmatprep.subr.mxu0 0.0
  %1072 = vmatpush1.msra.mxu0 %v1060
  %1073 = vmatprep.subr.mxu0 0.0
  %1074 = vmatpush1.msra.mxu0 0.0
  %1075 = vmatprep.subr.mxu0 0.0
  %1076 = vmatpush1.msra.mxu0 0.0
  %1077 = vmatprep.subr.mxu0 0.0
  %1078 = vmatpush1.msra.mxu0 0.0
  %1079 = vmatprep.subr.mxu0 0.0
  %1080 = vmatpush1.msra.mxu0 0.0
  %1081 = vmatprep.subr.mxu0 0.0
  %1082 = vmatpush1.msra.mxu0 0.0
  %1083 = vmatprep.subr.mxu0 0.0
  %1084 = vmatpush1.msra.mxu0 0.0
  %1085 = vmatprep.subr.mxu0 0.0
  %1086 = vmatpush1.msra.mxu0 0.0
  %1087 = vmatprep.subr.mxu0 0.0
  %1088 = vmatpush1.msra.mxu0 0.0
  %1089 = vmatprep.subr.mxu0 0.0
  %1090 = vmatpush1.msra.mxu0 0.0
  %1091 = vmatprep.subr.mxu0 0.0
  %1092 = vmatpush1.msra.mxu0 0.0
  %1093 = vmatprep.subr.mxu0 0.0
  %1094 = vmatpush1.msra.mxu0 0.0
  %1095 = vmatprep.subr.mxu0 0.0
  %1096 = vmatpush1.msra.mxu0 0.0
  %1097 = vmatprep.subr.mxu0 0.0
  %1098 = vmatpush1.msra.mxu0 0.0
  %1099 = vmatprep.subr.mxu0 0.0
  %1100 = vmatpush1.msra.mxu0 0.0
  %1101 = vmatprep.subr.mxu0 0.0
  %1102 = vmatpush1.msra.mxu0 0.0
  %1103 = vmatprep.subr.mxu0 0.0
  %1104 = vmatpush1.msra.mxu0 0.0
  %1105 = vmatprep.subr.mxu0 0.0
  %1106 = vmatpush1.msra.mxu0 0.0
  %1107 = vmatprep.subr.mxu0 0.0
  %1108 = vmatpush1.msra.mxu0 0.0
  %1109 = vmatprep.subr.mxu0 0.0
  %1110 = vmatpush1.msra.mxu0 0.0
  %1111 = vmatprep.subr.mxu0 0.0
  %1112 = vmatpush1.msra.mxu0 0.0
  %1113 = vmatprep.subr.mxu0 0.0
  %1114 = vmatpush1.msra.mxu0 0.0
  %1115 = vmatprep.subr.mxu0 0.0
  %1116 = vmatpush1.msra.mxu0 0.0
  %1117 = vmatprep.subr.mxu0 0.0
  %1118 = vmatpush1.msra.mxu0 0.0
  %1119 = vmatprep.subr.mxu0 0.0
  %1120 = vmatpush1.msra.mxu0 0.0
  %1121 = vmatprep.subr.mxu0 0.0
  %1122 = vmatpush1.msra.mxu0 0.0
  %1123 = vmatprep.subr.mxu0 0.0
  %1124 = vmatpush1.msra.mxu0 0.0
  %1125 = vmatprep.subr.mxu0 0.0
  %1126 = vmatpush1.msra.mxu0 0.0
  %1127 = vmatprep.subr.mxu0 0.0
  %1128 = vmatpush1.msra.mxu0 0.0
  %1129 = vmatprep.mubr.f32.mxu0 0.0
  %1130 = vmatmul.mubr.f32.gmra.mrb[0].mxu0 %v1063
  %v1131 = vpop.f32.mrb[0].mxu0
  %v1132 = vadd.f32 0.0, %v1131
  %v1133 = vpop.f32.mrb[0].mxu0
  %1134 = vdwg.mxu0
  %v1135 = vadd.f32 %v1056, %v1132
  %v1136 = vmul.f32 %v1135, 0.5
  %v1137 = vtanh.pop %v1136
  %v1138 = vmul.f32 %v1137, 0.5
  %v1139 = vadd.f32 %v1138, 0.5
  %v1140 = vtanh.pop %v1135
  %v1141 = vmul.f32 %v1139, %v934
  %1143 = vrot.lane.b32.xlu0 %v1140, 64
  %v1144 = vpop.permute.xlu0 %1143
  %v1146 = vmul.f32 %v1139, %v1144
  %1148 = vrot.lane.b32.xlu0 %v1146, 32
  %v1149 = vpop.permute.xlu0 %1148
  %v1151 = vadd.f32 %v1141, %v1149
  %v1152 = vtanh.pop %v1151
  %1154 = vrot.lane.b32.xlu0 %v1152, 64
  %v1155 = vpop.permute.xlu0 %1154
  %v1157 = vmul.f32 %v1139, %v1155
  %v1159 = vcombine.high %v1157, %v1157
  %v1161 = vunpack.c.l.s4 1966171168
  %v1162 = vunpack.c.0.s8 %v1161
  %v1163 = vlaneseq
  %v1164 = vshrl.u32 %v1163, 7
  %v1165 = vsub.s32 %v1162, %v1164
  %v1166 = vrot.slane %v1157, %v1165
  %v1168 = vunpack.c.l.s4 1966171168
  %v1169 = vunpack.c.0.s8 %v1168
  %v1170 = vlaneseq
  %v1171 = vshrl.u32 %v1170, 7
  %v1172 = vsub.s32 %v1169, %v1171
  %v1173 = vrot.slane %v1159, %v1172
  %v1174 = vcombine.high %v1166, %v1166
  %v1175 = vcombine.high %v1173, %v1173
  %v1177 = vunpack.c.l.s4 1966171168
  %v1178 = vunpack.c.0.s8 %v1177
  %v1179 = vlaneseq
  %v1180 = vshrl.u32 %v1179, 7
  %v1181 = vsub.s32 %v1178, %v1180
  %v1182 = vrot.slane %v1166, %v1181
  %v1184 = vunpack.c.l.s4 1966171168
  %v1185 = vunpack.c.0.s8 %v1184
  %v1186 = vlaneseq
  %v1187 = vshrl.u32 %v1186, 7
  %v1188 = vsub.s32 %v1185, %v1187
  %v1189 = vrot.slane %v1173, %v1188
  %v1191 = vunpack.c.l.s4 1966171168
  %v1192 = vunpack.c.0.s8 %v1191
  %v1193 = vlaneseq
  %v1194 = vshrl.u32 %v1193, 7
  %v1195 = vsub.s32 %v1192, %v1194
  %v1196 = vrot.slane %v1174, %v1195
  %v1198 = vunpack.c.l.s4 1966171168
  %v1199 = vunpack.c.0.s8 %v1198
  %v1200 = vlaneseq
  %v1201 = vshrl.u32 %v1200, 7
  %v1202 = vsub.s32 %v1199, %v1201
  %v1203 = vrot.slane %v1175, %v1202
  %v1204 = vcombine.high %v1182, %v1182
  %v1205 = vcombine.high %v1189, %v1189
  %v1206 = vcombine.high %v1196, %v1196
  %v1207 = vcombine.high %v1203, %v1203
  %v1208 = vlaneseq
  %v1209 = vshrl.u32 %v1208, 7
  %v1210 = vsub.s32 0, %v1209
  %v1211 = vrot.slane %v1182, %v1210
  %v1212 = vlaneseq
  %v1213 = vshrl.u32 %v1212, 7
  %v1214 = vsub.s32 0, %v1213
  %v1215 = vrot.slane %v1196, %v1214
  %v1216 = vlaneseq
  %v1217 = vshrl.u32 %v1216, 7
  %v1218 = vsub.s32 0, %v1217
  %v1219 = vrot.slane %v1204, %v1218
  %v1220 = vlaneseq
  %v1221 = vshrl.u32 %v1220, 7
  %v1222 = vsub.s32 0, %v1221
  %v1223 = vrot.slane %v1206, %v1222
  %v1224 = vlaneseq
  %v1225 = vshrl.u32 %v1224, 7
  %v1226 = vsub.s32 0, %v1225
  %v1227 = vrot.slane %v1189, %v1226
  %v1228 = vlaneseq
  %v1229 = vshrl.u32 %v1228, 7
  %v1230 = vsub.s32 0, %v1229
  %v1231 = vrot.slane %v1203, %v1230
  %v1232 = vlaneseq
  %v1233 = vshrl.u32 %v1232, 7
  %v1234 = vsub.s32 0, %v1233
  %v1235 = vrot.slane %v1205, %v1234
  %v1236 = vlaneseq
  %v1237 = vshrl.u32 %v1236, 7
  %v1238 = vsub.s32 0, %v1237
  %v1239 = vrot.slane %v1207, %v1238
  %1240 = vrot.lane.b32.xlu0 %v1211, 32
  %v1241 = vpop.permute.xlu0 %1240
  %1242 = vrot.lane.b32.xlu0 %v1215, 32
  %v1243 = vpop.permute.xlu0 %1242
  %1244 = vrot.lane.b32.xlu0 %v1219, 32
  %v1245 = vpop.permute.xlu0 %1244
  %1246 = vrot.lane.b32.xlu0 %v1223, 32
  %v1247 = vpop.permute.xlu0 %1246
  %1248 = vrot.lane.b32.xlu0 %v1227, 32
  %v1249 = vpop.permute.xlu0 %1248
  %1250 = vrot.lane.b32.xlu0 %v1231, 32
  %v1251 = vpop.permute.xlu0 %1250
  %1252 = vrot.lane.b32.xlu0 %v1235, 32
  %v1253 = vpop.permute.xlu0 %1252
  %1254 = vrot.lane.b32.xlu0 %v1239, 32
  %v1255 = vpop.permute.xlu0 %1254
  %1264 = vst.msk [vmem:[%s4 + $0x4] sm:$0x1] %vm395, %v1241
  %1265 = vst.msk [vmem:[%s4 + $0xc] sm:$0x1] %vm395, %v1243
  %1266 = vst.msk [vmem:[%s4 + $0x14] sm:$0x1] %vm395, %v1245
  %1267 = vst.msk [vmem:[%s4 + $0x1c] sm:$0x1] %vm395, %v1247
  %1268 = vst.msk [vmem:[%s4 + $0x24] sm:$0x1] %vm395, %v1249
  %1269 = vst.msk [vmem:[%s4 + $0x2c] sm:$0x1] %vm395, %v1251
  %1270 = vst.msk [vmem:[%s4 + $0x34] sm:$0x1] %vm395, %v1253
  %1271 = vst.msk [vmem:[%s4 + $0x3c] sm:$0x1] %vm395, %v1255
  %s1272 = scalar_lea.vmem [#allocation3], 40
  %v1273 = vld [vmem:[%s1272] sm:$0xff]
  %v1274 = vld [vmem:[%s2] sm:$0xff]
  %v1275 = vld [vmem:[%s2 + $0x8] sm:$0xff]
  %v1276 = vld [vmem:[%s2 + $0x10] sm:$0xff]
  %v1277 = vld [vmem:[%s2 + $0x18] sm:$0xff]
  %1278 = vrot.lane.b32.xlu0 %v1157, 32
  %v1279 = vpop.permute.xlu0 %1278
  %v1280 = vsel %vm43, %v1279, 0
  %1282 = vmatprep.subr.mxu0 0.0
  %1283 = vmatpush1.msra.mxu0 %v1274
  %1284 = vmatprep.subr.mxu0 0.0
  %1285 = vmatpush1.msra.mxu0 %v1275
  %1286 = vmatprep.subr.mxu0 0.0
  %1287 = vmatpush1.msra.mxu0 %v1276
  %1288 = vmatprep.subr.mxu0 0.0
  %1289 = vmatpush1.msra.mxu0 %v1277
  %1290 = vmatprep.subr.mxu0 0.0
  %1291 = vmatpush1.msra.mxu0 0.0
  %1292 = vmatprep.subr.mxu0 0.0
  %1293 = vmatpush1.msra.mxu0 0.0
  %1294 = vmatprep.subr.mxu0 0.0
  %1295 = vmatpush1.msra.mxu0 0.0
  %1296 = vmatprep.subr.mxu0 0.0
  %1297 = vmatpush1.msra.mxu0 0.0
  %1298 = vmatprep.subr.mxu0 0.0
  %1299 = vmatpush1.msra.mxu0 0.0
  %1300 = vmatprep.subr.mxu0 0.0
  %1301 = vmatpush1.msra.mxu0 0.0
  %1302 = vmatprep.subr.mxu0 0.0
  %1303 = vmatpush1.msra.mxu0 0.0
  %1304 = vmatprep.subr.mxu0 0.0
  %1305 = vmatpush1.msra.mxu0 0.0
  %1306 = vmatprep.subr.mxu0 0.0
  %1307 = vmatpush1.msra.mxu0 0.0
  %1308 = vmatprep.subr.mxu0 0.0
  %1309 = vmatpush1.msra.mxu0 0.0
  %1310 = vmatprep.subr.mxu0 0.0
  %1311 = vmatpush1.msra.mxu0 0.0
  %1312 = vmatprep.subr.mxu0 0.0
  %1313 = vmatpush1.msra.mxu0 0.0
  %1314 = vmatprep.subr.mxu0 0.0
  %1315 = vmatpush1.msra.mxu0 0.0
  %1316 = vmatprep.subr.mxu0 0.0
  %1317 = vmatpush1.msra.mxu0 0.0
  %1318 = vmatprep.subr.mxu0 0.0
  %1319 = vmatpush1.msra.mxu0 0.0
  %1320 = vmatprep.subr.mxu0 0.0
  %1321 = vmatpush1.msra.mxu0 0.0
  %1322 = vmatprep.subr.mxu0 0.0
  %1323 = vmatpush1.msra.mxu0 0.0
  %1324 = vmatprep.subr.mxu0 0.0
  %1325 = vmatpush1.msra.mxu0 0.0
  %1326 = vmatprep.subr.mxu0 0.0
  %1327 = vmatpush1.msra.mxu0 0.0
  %1328 = vmatprep.subr.mxu0 0.0
  %1329 = vmatpush1.msra.mxu0 0.0
  %1330 = vmatprep.subr.mxu0 0.0
  %1331 = vmatpush1.msra.mxu0 0.0
  %1332 = vmatprep.subr.mxu0 0.0
  %1333 = vmatpush1.msra.mxu0 0.0
  %1334 = vmatprep.subr.mxu0 0.0
  %1335 = vmatpush1.msra.mxu0 0.0
  %1336 = vmatprep.subr.mxu0 0.0
  %1337 = vmatpush1.msra.mxu0 0.0
  %1338 = vmatprep.subr.mxu0 0.0
  %1339 = vmatpush1.msra.mxu0 0.0
  %1340 = vmatprep.subr.mxu0 0.0
  %1341 = vmatpush1.msra.mxu0 0.0
  %1342 = vmatprep.subr.mxu0 0.0
  %1343 = vmatpush1.msra.mxu0 0.0
  %1344 = vmatprep.subr.mxu0 0.0
  %1345 = vmatpush1.msra.mxu0 0.0
  %1346 = vmatprep.mubr.f32.mxu0 0.0
  %1347 = vmatmul.mubr.f32.gmra.mrb[0].mxu0 %v1280
  %v1348 = vpop.f32.mrb[0].mxu0
  %v1349 = vadd.f32 0.0, %v1348
  %v1350 = vpop.f32.mrb[0].mxu0
  %1351 = vdwg.mxu0
  %v1352 = vadd.f32 %v1273, %v1349
  %v1353 = vmul.f32 %v1352, 0.5
  %v1354 = vtanh.pop %v1353
  %v1355 = vmul.f32 %v1354, 0.5
  %v1356 = vadd.f32 %v1355, 0.5
  %v1357 = vtanh.pop %v1352
  %v1358 = vmul.f32 %v1356, %v1151
  %1360 = vrot.lane.b32.xlu0 %v1357, 64
  %v1361 = vpop.permute.xlu0 %1360
  %v1363 = vmul.f32 %v1356, %v1361
  %1365 = vrot.lane.b32.xlu0 %v1363, 32
  %v1366 = vpop.permute.xlu0 %1365
  %v1368 = vadd.f32 %v1358, %v1366
  %v1369 = vtanh.pop %v1368
  %1371 = vrot.lane.b32.xlu0 %v1369, 64
  %v1372 = vpop.permute.xlu0 %1371
  %v1374 = vmul.f32 %v1356, %v1372
  %v1376 = vcombine.high %v1374, %v1374
  %v1378 = vunpack.c.l.s4 1966171168
  %v1379 = vunpack.c.0.s8 %v1378
  %v1380 = vlaneseq
  %v1381 = vshrl.u32 %v1380, 7
  %v1382 = vsub.s32 %v1379, %v1381
  %v1383 = vrot.slane %v1374, %v1382
  %v1385 = vunpack.c.l.s4 1966171168
  %v1386 = vunpack.c.0.s8 %v1385
  %v1387 = vlaneseq
  %v1388 = vshrl.u32 %v1387, 7
  %v1389 = vsub.s32 %v1386, %v1388
  %v1390 = vrot.slane %v1376, %v1389
  %v1391 = vcombine.high %v1383, %v1383
  %v1392 = vcombine.high %v1390, %v1390
  %v1394 = vunpack.c.l.s4 1966171168
  %v1395 = vunpack.c.0.s8 %v1394
  %v1396 = vlaneseq
  %v1397 = vshrl.u32 %v1396, 7
  %v1398 = vsub.s32 %v1395, %v1397
  %v1399 = vrot.slane %v1383, %v1398
  %v1401 = vunpack.c.l.s4 1966171168
  %v1402 = vunpack.c.0.s8 %v1401
  %v1403 = vlaneseq
  %v1404 = vshrl.u32 %v1403, 7
  %v1405 = vsub.s32 %v1402, %v1404
  %v1406 = vrot.slane %v1390, %v1405
  %v1408 = vunpack.c.l.s4 1966171168
  %v1409 = vunpack.c.0.s8 %v1408
  %v1410 = vlaneseq
  %v1411 = vshrl.u32 %v1410, 7
  %v1412 = vsub.s32 %v1409, %v1411
  %v1413 = vrot.slane %v1391, %v1412
  %v1415 = vunpack.c.l.s4 1966171168
  %v1416 = vunpack.c.0.s8 %v1415
  %v1417 = vlaneseq
  %v1418 = vshrl.u32 %v1417, 7
  %v1419 = vsub.s32 %v1416, %v1418
  %v1420 = vrot.slane %v1392, %v1419
  %v1421 = vcombine.high %v1399, %v1399
  %v1422 = vcombine.high %v1406, %v1406
  %v1423 = vcombine.high %v1413, %v1413
  %v1424 = vcombine.high %v1420, %v1420
  %v1425 = vlaneseq
  %v1426 = vshrl.u32 %v1425, 7
  %v1427 = vsub.s32 0, %v1426
  %v1428 = vrot.slane %v1399, %v1427
  %v1429 = vlaneseq
  %v1430 = vshrl.u32 %v1429, 7
  %v1431 = vsub.s32 0, %v1430
  %v1432 = vrot.slane %v1413, %v1431
  %v1433 = vlaneseq
  %v1434 = vshrl.u32 %v1433, 7
  %v1435 = vsub.s32 0, %v1434
  %v1436 = vrot.slane %v1421, %v1435
  %v1437 = vlaneseq
  %v1438 = vshrl.u32 %v1437, 7
  %v1439 = vsub.s32 0, %v1438
  %v1440 = vrot.slane %v1423, %v1439
  %v1441 = vlaneseq
  %v1442 = vshrl.u32 %v1441, 7
  %v1443 = vsub.s32 0, %v1442
  %v1444 = vrot.slane %v1406, %v1443
  %v1445 = vlaneseq
  %v1446 = vshrl.u32 %v1445, 7
  %v1447 = vsub.s32 0, %v1446
  %v1448 = vrot.slane %v1420, %v1447
  %v1449 = vlaneseq
  %v1450 = vshrl.u32 %v1449, 7
  %v1451 = vsub.s32 0, %v1450
  %v1452 = vrot.slane %v1422, %v1451
  %v1453 = vlaneseq
  %v1454 = vshrl.u32 %v1453, 7
  %v1455 = vsub.s32 0, %v1454
  %v1456 = vrot.slane %v1424, %v1455
  %1457 = vrot.lane.b32.xlu0 %v1428, 32
  %v1458 = vpop.permute.xlu0 %1457
  %1459 = vrot.lane.b32.xlu0 %v1432, 32
  %v1460 = vpop.permute.xlu0 %1459
  %1461 = vrot.lane.b32.xlu0 %v1436, 32
  %v1462 = vpop.permute.xlu0 %1461
  %1463 = vrot.lane.b32.xlu0 %v1440, 32
  %v1464 = vpop.permute.xlu0 %1463
  %1465 = vrot.lane.b32.xlu0 %v1444, 32
  %v1466 = vpop.permute.xlu0 %1465
  %1467 = vrot.lane.b32.xlu0 %v1448, 32
  %v1468 = vpop.permute.xlu0 %1467
  %1469 = vrot.lane.b32.xlu0 %v1452, 32
  %v1470 = vpop.permute.xlu0 %1469
  %1471 = vrot.lane.b32.xlu0 %v1456, 32
  %v1472 = vpop.permute.xlu0 %1471
  %1481 = vst.msk [vmem:[%s4 + $0x5] sm:$0x1] %vm395, %v1458
  %1482 = vst.msk [vmem:[%s4 + $0xd] sm:$0x1] %vm395, %v1460
  %1483 = vst.msk [vmem:[%s4 + $0x15] sm:$0x1] %vm395, %v1462
  %1484 = vst.msk [vmem:[%s4 + $0x1d] sm:$0x1] %vm395, %v1464
  %1485 = vst.msk [vmem:[%s4 + $0x25] sm:$0x1] %vm395, %v1466
  %1486 = vst.msk [vmem:[%s4 + $0x2d] sm:$0x1] %vm395, %v1468
  %1487 = vst.msk [vmem:[%s4 + $0x35] sm:$0x1] %vm395, %v1470
  %1488 = vst.msk [vmem:[%s4 + $0x3d] sm:$0x1] %vm395, %v1472
  %s1489 = scalar_lea.vmem [#allocation3], 48
  %v1490 = vld [vmem:[%s1489] sm:$0xff]
  %v1491 = vld [vmem:[%s2] sm:$0xff]
  %v1492 = vld [vmem:[%s2 + $0x8] sm:$0xff]
  %v1493 = vld [vmem:[%s2 + $0x10] sm:$0xff]
  %v1494 = vld [vmem:[%s2 + $0x18] sm:$0xff]
  %1495 = vrot.lane.b32.xlu0 %v1374, 32
  %v1496 = vpop.permute.xlu0 %1495
  %v1497 = vsel %vm43, %v1496, 0
  %1499 = vmatprep.subr.mxu0 0.0
  %1500 = vmatpush1.msra.mxu0 %v1491
  %1501 = vmatprep.subr.mxu0 0.0
  %1502 = vmatpush1.msra.mxu0 %v1492
  %1503 = vmatprep.subr.mxu0 0.0
  %1504 = vmatpush1.msra.mxu0 %v1493
  %1505 = vmatprep.subr.mxu0 0.0
  %1506 = vmatpush1.msra.mxu0 %v1494
  %1507 = vmatprep.subr.mxu0 0.0
  %1508 = vmatpush1.msra.mxu0 0.0
  %1509 = vmatprep.subr.mxu0 0.0
  %1510 = vmatpush1.msra.mxu0 0.0
  %1511 = vmatprep.subr.mxu0 0.0
  %1512 = vmatpush1.msra.mxu0 0.0
  %1513 = vmatprep.subr.mxu0 0.0
  %1514 = vmatpush1.msra.mxu0 0.0
  %1515 = vmatprep.subr.mxu0 0.0
  %1516 = vmatpush1.msra.mxu0 0.0
  %1517 = vmatprep.subr.mxu0 0.0
  %1518 = vmatpush1.msra.mxu0 0.0
  %1519 = vmatprep.subr.mxu0 0.0
  %1520 = vmatpush1.msra.mxu0 0.0
  %1521 = vmatprep.subr.mxu0 0.0
  %1522 = vmatpush1.msra.mxu0 0.0
  %1523 = vmatprep.subr.mxu0 0.0
  %1524 = vmatpush1.msra.mxu0 0.0
  %1525 = vmatprep.subr.mxu0 0.0
  %1526 = vmatpush1.msra.mxu0 0.0
  %1527 = vmatprep.subr.mxu0 0.0
  %1528 = vmatpush1.msra.mxu0 0.0
  %1529 = vmatprep.subr.mxu0 0.0
  %1530 = vmatpush1.msra.mxu0 0.0
  %1531 = vmatprep.subr.mxu0 0.0
  %1532 = vmatpush1.msra.mxu0 0.0
  %1533 = vmatprep.subr.mxu0 0.0
  %1534 = vmatpush1.msra.mxu0 0.0
  %1535 = vmatprep.subr.mxu0 0.0
  %1536 = vmatpush1.msra.mxu0 0.0
  %1537 = vmatprep.subr.mxu0 0.0
  %1538 = vmatpush1.msra.mxu0 0.0
  %1539 = vmatprep.subr.mxu0 0.0
  %1540 = vmatpush1.msra.mxu0 0.0
  %1541 = vmatprep.subr.mxu0 0.0
  %1542 = vmatpush1.msra.mxu0 0.0
  %1543 = vmatprep.subr.mxu0 0.0
  %1544 = vmatpush1.msra.mxu0 0.0
  %1545 = vmatprep.subr.mxu0 0.0
  %1546 = vmatpush1.msra.mxu0 0.0
  %1547 = vmatprep.subr.mxu0 0.0
  %1548 = vmatpush1.msra.mxu0 0.0
  %1549 = vmatprep.subr.mxu0 0.0
  %1550 = vmatpush1.msra.mxu0 0.0
  %1551 = vmatprep.subr.mxu0 0.0
  %1552 = vmatpush1.msra.mxu0 0.0
  %1553 = vmatprep.subr.mxu0 0.0
  %1554 = vmatpush1.msra.mxu0 0.0
  %1555 = vmatprep.subr.mxu0 0.0
  %1556 = vmatpush1.msra.mxu0 0.0
  %1557 = vmatprep.subr.mxu0 0.0
  %1558 = vmatpush1.msra.mxu0 0.0
  %1559 = vmatprep.subr.mxu0 0.0
  %1560 = vmatpush1.msra.mxu0 0.0
  %1561 = vmatprep.subr.mxu0 0.0
  %1562 = vmatpush1.msra.mxu0 0.0
  %1563 = vmatprep.mubr.f32.mxu0 0.0
  %1564 = vmatmul.mubr.f32.gmra.mrb[0].mxu0 %v1497
  %v1565 = vpop.f32.mrb[0].mxu0
  %v1566 = vadd.f32 0.0, %v1565
  %v1567 = vpop.f32.mrb[0].mxu0
  %1568 = vdwg.mxu0
  %v1569 = vadd.f32 %v1490, %v1566
  %v1570 = vmul.f32 %v1569, 0.5
  %v1571 = vtanh.pop %v1570
  %v1572 = vmul.f32 %v1571, 0.5
  %v1573 = vadd.f32 %v1572, 0.5
  %v1574 = vtanh.pop %v1569
  %v1575 = vmul.f32 %v1573, %v1368
  %1577 = vrot.lane.b32.xlu0 %v1574, 64
  %v1578 = vpop.permute.xlu0 %1577
  %v1580 = vmul.f32 %v1573, %v1578
  %1582 = vrot.lane.b32.xlu0 %v1580, 32
  %v1583 = vpop.permute.xlu0 %1582
  %v1585 = vadd.f32 %v1575, %v1583
  %v1586 = vtanh.pop %v1585
  %1588 = vrot.lane.b32.xlu0 %v1586, 64
  %v1589 = vpop.permute.xlu0 %1588
  %v1591 = vmul.f32 %v1573, %v1589
  %v1593 = vcombine.high %v1591, %v1591
  %v1595 = vunpack.c.l.s4 1966171168
  %v1596 = vunpack.c.0.s8 %v1595
  %v1597 = vlaneseq
  %v1598 = vshrl.u32 %v1597, 7
  %v1599 = vsub.s32 %v1596, %v1598
  %v1600 = vrot.slane %v1591, %v1599
  %v1602 = vunpack.c.l.s4 1966171168
  %v1603 = vunpack.c.0.s8 %v1602
  %v1604 = vlaneseq
  %v1605 = vshrl.u32 %v1604, 7
  %v1606 = vsub.s32 %v1603, %v1605
  %v1607 = vrot.slane %v1593, %v1606
  %v1608 = vcombine.high %v1600, %v1600
  %v1609 = vcombine.high %v1607, %v1607
  %v1611 = vunpack.c.l.s4 1966171168
  %v1612 = vunpack.c.0.s8 %v1611
  %v1613 = vlaneseq
  %v1614 = vshrl.u32 %v1613, 7
  %v1615 = vsub.s32 %v1612, %v1614
  %v1616 = vrot.slane %v1600, %v1615
  %v1618 = vunpack.c.l.s4 1966171168
  %v1619 = vunpack.c.0.s8 %v1618
  %v1620 = vlaneseq
  %v1621 = vshrl.u32 %v1620, 7
  %v1622 = vsub.s32 %v1619, %v1621
  %v1623 = vrot.slane %v1607, %v1622
  %v1625 = vunpack.c.l.s4 1966171168
  %v1626 = vunpack.c.0.s8 %v1625
  %v1627 = vlaneseq
  %v1628 = vshrl.u32 %v1627, 7
  %v1629 = vsub.s32 %v1626, %v1628
  %v1630 = vrot.slane %v1608, %v1629
  %v1632 = vunpack.c.l.s4 1966171168
  %v1633 = vunpack.c.0.s8 %v1632
  %v1634 = vlaneseq
  %v1635 = vshrl.u32 %v1634, 7
  %v1636 = vsub.s32 %v1633, %v1635
  %v1637 = vrot.slane %v1609, %v1636
  %v1638 = vcombine.high %v1616, %v1616
  %v1639 = vcombine.high %v1623, %v1623
  %v1640 = vcombine.high %v1630, %v1630
  %v1641 = vcombine.high %v1637, %v1637
  %v1642 = vlaneseq
  %v1643 = vshrl.u32 %v1642, 7
  %v1644 = vsub.s32 0, %v1643
  %v1645 = vrot.slane %v1616, %v1644
  %v1646 = vlaneseq
  %v1647 = vshrl.u32 %v1646, 7
  %v1648 = vsub.s32 0, %v1647
  %v1649 = vrot.slane %v1630, %v1648
  %v1650 = vlaneseq
  %v1651 = vshrl.u32 %v1650, 7
  %v1652 = vsub.s32 0, %v1651
  %v1653 = vrot.slane %v1638, %v1652
  %v1654 = vlaneseq
  %v1655 = vshrl.u32 %v1654, 7
  %v1656 = vsub.s32 0, %v1655
  %v1657 = vrot.slane %v1640, %v1656
  %v1658 = vlaneseq
  %v1659 = vshrl.u32 %v1658, 7
  %v1660 = vsub.s32 0, %v1659
  %v1661 = vrot.slane %v1623, %v1660
  %v1662 = vlaneseq
  %v1663 = vshrl.u32 %v1662, 7
  %v1664 = vsub.s32 0, %v1663
  %v1665 = vrot.slane %v1637, %v1664
  %v1666 = vlaneseq
  %v1667 = vshrl.u32 %v1666, 7
  %v1668 = vsub.s32 0, %v1667
  %v1669 = vrot.slane %v1639, %v1668
  %v1670 = vlaneseq
  %v1671 = vshrl.u32 %v1670, 7
  %v1672 = vsub.s32 0, %v1671
  %v1673 = vrot.slane %v1641, %v1672
  %1674 = vrot.lane.b32.xlu0 %v1645, 32
  %v1675 = vpop.permute.xlu0 %1674
  %1676 = vrot.lane.b32.xlu0 %v1649, 32
  %v1677 = vpop.permute.xlu0 %1676
  %1678 = vrot.lane.b32.xlu0 %v1653, 32
  %v1679 = vpop.permute.xlu0 %1678
  %1680 = vrot.lane.b32.xlu0 %v1657, 32
  %v1681 = vpop.permute.xlu0 %1680
  %1682 = vrot.lane.b32.xlu0 %v1661, 32
  %v1683 = vpop.permute.xlu0 %1682
  %1684 = vrot.lane.b32.xlu0 %v1665, 32
  %v1685 = vpop.permute.xlu0 %1684
  %1686 = vrot.lane.b32.xlu0 %v1669, 32
  %v1687 = vpop.permute.xlu0 %1686
  %1688 = vrot.lane.b32.xlu0 %v1673, 32
  %v1689 = vpop.permute.xlu0 %1688
  %1698 = vst.msk [vmem:[%s4 + $0x6] sm:$0x1] %vm395, %v1675
  %1699 = vst.msk [vmem:[%s4 + $0xe] sm:$0x1] %vm395, %v1677
  %1700 = vst.msk [vmem:[%s4 + $0x16] sm:$0x1] %vm395, %v1679
  %1701 = vst.msk [vmem:[%s4 + $0x1e] sm:$0x1] %vm395, %v1681
  %1702 = vst.msk [vmem:[%s4 + $0x26] sm:$0x1] %vm395, %v1683
  %1703 = vst.msk [vmem:[%s4 + $0x2e] sm:$0x1] %vm395, %v1685
  %1704 = vst.msk [vmem:[%s4 + $0x36] sm:$0x1] %vm395, %v1687
  %1705 = vst.msk [vmem:[%s4 + $0x3e] sm:$0x1] %vm395, %v1689
  %s1706 = scalar_lea.vmem [#allocation3], 56
  %v1707 = vld [vmem:[%s1706] sm:$0xff]
  %v1708 = vld [vmem:[%s2] sm:$0xff]
  %v1709 = vld [vmem:[%s2 + $0x8] sm:$0xff]
  %v1710 = vld [vmem:[%s2 + $0x10] sm:$0xff]
  %v1711 = vld [vmem:[%s2 + $0x18] sm:$0xff]
  %1712 = vrot.lane.b32.xlu0 %v1591, 32
  %v1713 = vpop.permute.xlu0 %1712
  %v1714 = vsel %vm43, %v1713, 0
  %1716 = vmatprep.subr.mxu0 0.0
  %1717 = vmatpush1.msra.mxu0 %v1708
  %1718 = vmatprep.subr.mxu0 0.0
  %1719 = vmatpush1.msra.mxu0 %v1709
  %1720 = vmatprep.subr.mxu0 0.0
  %1721 = vmatpush1.msra.mxu0 %v1710
  %1722 = vmatprep.subr.mxu0 0.0
  %1723 = vmatpush1.msra.mxu0 %v1711
  %1724 = vmatprep.subr.mxu0 0.0
  %1725 = vmatpush1.msra.mxu0 0.0
  %1726 = vmatprep.subr.mxu0 0.0
  %1727 = vmatpush1.msra.mxu0 0.0
  %1728 = vmatprep.subr.mxu0 0.0
  %1729 = vmatpush1.msra.mxu0 0.0
  %1730 = vmatprep.subr.mxu0 0.0
  %1731 = vmatpush1.msra.mxu0 0.0
  %1732 = vmatprep.subr.mxu0 0.0
  %1733 = vmatpush1.msra.mxu0 0.0
  %1734 = vmatprep.subr.mxu0 0.0
  %1735 = vmatpush1.msra.mxu0 0.0
  %1736 = vmatprep.subr.mxu0 0.0
  %1737 = vmatpush1.msra.mxu0 0.0
  %1738 = vmatprep.subr.mxu0 0.0
  %1739 = vmatpush1.msra.mxu0 0.0
  %1740 = vmatprep.subr.mxu0 0.0
  %1741 = vmatpush1.msra.mxu0 0.0
  %1742 = vmatprep.subr.mxu0 0.0
  %1743 = vmatpush1.msra.mxu0 0.0
  %1744 = vmatprep.subr.mxu0 0.0
  %1745 = vmatpush1.msra.mxu0 0.0
  %1746 = vmatprep.subr.mxu0 0.0
  %1747 = vmatpush1.msra.mxu0 0.0
  %1748 = vmatprep.subr.mxu0 0.0
  %1749 = vmatpush1.msra.mxu0 0.0
  %1750 = vmatprep.subr.mxu0 0.0
  %1751 = vmatpush1.msra.mxu0 0.0
  %1752 = vmatprep.subr.mxu0 0.0
  %1753 = vmatpush1.msra.mxu0 0.0
  %1754 = vmatprep.subr.mxu0 0.0
  %1755 = vmatpush1.msra.mxu0 0.0
  %1756 = vmatprep.subr.mxu0 0.0
  %1757 = vmatpush1.msra.mxu0 0.0
  %1758 = vmatprep.subr.mxu0 0.0
  %1759 = vmatpush1.msra.mxu0 0.0
  %1760 = vmatprep.subr.mxu0 0.0
  %1761 = vmatpush1.msra.mxu0 0.0
  %1762 = vmatprep.subr.mxu0 0.0
  %1763 = vmatpush1.msra.mxu0 0.0
  %1764 = vmatprep.subr.mxu0 0.0
  %1765 = vmatpush1.msra.mxu0 0.0
  %1766 = vmatprep.subr.mxu0 0.0
  %1767 = vmatpush1.msra.mxu0 0.0
  %1768 = vmatprep.subr.mxu0 0.0
  %1769 = vmatpush1.msra.mxu0 0.0
  %1770 = vmatprep.subr.mxu0 0.0
  %1771 = vmatpush1.msra.mxu0 0.0
  %1772 = vmatprep.subr.mxu0 0.0
  %1773 = vmatpush1.msra.mxu0 0.0
  %1774 = vmatprep.subr.mxu0 0.0
  %1775 = vmatpush1.msra.mxu0 0.0
  %1776 = vmatprep.subr.mxu0 0.0
  %1777 = vmatpush1.msra.mxu0 0.0
  %1778 = vmatprep.subr.mxu0 0.0
  %1779 = vmatpush1.msra.mxu0 0.0
  %1780 = vmatprep.mubr.f32.mxu0 0.0
  %1781 = vmatmul.mubr.f32.gmra.mrb[0].mxu0 %v1714
  %v1782 = vpop.f32.mrb[0].mxu0
  %v1783 = vadd.f32 0.0, %v1782
  %v1784 = vpop.f32.mrb[0].mxu0
  %1785 = vdwg.mxu0
  %v1786 = vadd.f32 %v1707, %v1783
  %v1787 = vmul.f32 %v1786, 0.5
  %v1788 = vtanh.pop %v1787
  %v1789 = vmul.f32 %v1788, 0.5
  %v1790 = vadd.f32 %v1789, 0.5
  %v1791 = vtanh.pop %v1786
  %v1792 = vmul.f32 %v1790, %v1585
  %1794 = vrot.lane.b32.xlu0 %v1791, 64
  %v1795 = vpop.permute.xlu0 %1794
  %v1797 = vmul.f32 %v1790, %v1795
  %1799 = vrot.lane.b32.xlu0 %v1797, 32
  %v1800 = vpop.permute.xlu0 %1799
  %v1802 = vadd.f32 %v1792, %v1800
  %v1803 = vtanh.pop %v1802
  %1805 = vrot.lane.b32.xlu0 %v1803, 64
  %v1806 = vpop.permute.xlu0 %1805
  %v1808 = vmul.f32 %v1790, %v1806
  %v1810 = vcombine.high %v1808, %v1808
  %v1812 = vunpack.c.l.s4 1966171168
  %v1813 = vunpack.c.0.s8 %v1812
  %v1814 = vlaneseq
  %v1815 = vshrl.u32 %v1814, 7
  %v1816 = vsub.s32 %v1813, %v1815
  %v1817 = vrot.slane %v1808, %v1816
  %v1819 = vunpack.c.l.s4 1966171168
  %v1820 = vunpack.c.0.s8 %v1819
  %v1821 = vlaneseq
  %v1822 = vshrl.u32 %v1821, 7
  %v1823 = vsub.s32 %v1820, %v1822
  %v1824 = vrot.slane %v1810, %v1823
  %v1825 = vcombine.high %v1817, %v1817
  %v1826 = vcombine.high %v1824, %v1824
  %v1828 = vunpack.c.l.s4 1966171168
  %v1829 = vunpack.c.0.s8 %v1828
  %v1830 = vlaneseq
  %v1831 = vshrl.u32 %v1830, 7
  %v1832 = vsub.s32 %v1829, %v1831
  %v1833 = vrot.slane %v1817, %v1832
  %v1835 = vunpack.c.l.s4 1966171168
  %v1836 = vunpack.c.0.s8 %v1835
  %v1837 = vlaneseq
  %v1838 = vshrl.u32 %v1837, 7
  %v1839 = vsub.s32 %v1836, %v1838
  %v1840 = vrot.slane %v1824, %v1839
  %v1842 = vunpack.c.l.s4 1966171168
  %v1843 = vunpack.c.0.s8 %v1842
  %v1844 = vlaneseq
  %v1845 = vshrl.u32 %v1844, 7
  %v1846 = vsub.s32 %v1843, %v1845
  %v1847 = vrot.slane %v1825, %v1846
  %v1849 = vunpack.c.l.s4 1966171168
  %v1850 = vunpack.c.0.s8 %v1849
  %v1851 = vlaneseq
  %v1852 = vshrl.u32 %v1851, 7
  %v1853 = vsub.s32 %v1850, %v1852
  %v1854 = vrot.slane %v1826, %v1853
  %v1855 = vcombine.high %v1833, %v1833
  %v1856 = vcombine.high %v1840, %v1840
  %v1857 = vcombine.high %v1847, %v1847
  %v1858 = vcombine.high %v1854, %v1854
  %v1859 = vlaneseq
  %v1860 = vshrl.u32 %v1859, 7
  %v1861 = vsub.s32 0, %v1860
  %v1862 = vrot.slane %v1833, %v1861
  %v1863 = vlaneseq
  %v1864 = vshrl.u32 %v1863, 7
  %v1865 = vsub.s32 0, %v1864
  %v1866 = vrot.slane %v1847, %v1865
  %v1867 = vlaneseq
  %v1868 = vshrl.u32 %v1867, 7
  %v1869 = vsub.s32 0, %v1868
  %v1870 = vrot.slane %v1855, %v1869
  %v1871 = vlaneseq
  %v1872 = vshrl.u32 %v1871, 7
  %v1873 = vsub.s32 0, %v1872
  %v1874 = vrot.slane %v1857, %v1873
  %v1875 = vlaneseq
  %v1876 = vshrl.u32 %v1875, 7
  %v1877 = vsub.s32 0, %v1876
  %v1878 = vrot.slane %v1840, %v1877
  %v1879 = vlaneseq
  %v1880 = vshrl.u32 %v1879, 7
  %v1881 = vsub.s32 0, %v1880
  %v1882 = vrot.slane %v1854, %v1881
  %v1883 = vlaneseq
  %v1884 = vshrl.u32 %v1883, 7
  %v1885 = vsub.s32 0, %v1884
  %v1886 = vrot.slane %v1856, %v1885
  %v1887 = vlaneseq
  %v1888 = vshrl.u32 %v1887, 7
  %v1889 = vsub.s32 0, %v1888
  %v1890 = vrot.slane %v1858, %v1889
  %1891 = vrot.lane.b32.xlu0 %v1862, 32
  %v1892 = vpop.permute.xlu0 %1891
  %1893 = vrot.lane.b32.xlu0 %v1866, 32
  %v1894 = vpop.permute.xlu0 %1893
  %1895 = vrot.lane.b32.xlu0 %v1870, 32
  %v1896 = vpop.permute.xlu0 %1895
  %1897 = vrot.lane.b32.xlu0 %v1874, 32
  %v1898 = vpop.permute.xlu0 %1897
  %1899 = vrot.lane.b32.xlu0 %v1878, 32
  %v1900 = vpop.permute.xlu0 %1899
  %1901 = vrot.lane.b32.xlu0 %v1882, 32
  %v1902 = vpop.permute.xlu0 %1901
  %1903 = vrot.lane.b32.xlu0 %v1886, 32
  %v1904 = vpop.permute.xlu0 %1903
  %1905 = vrot.lane.b32.xlu0 %v1890, 32
  %v1906 = vpop.permute.xlu0 %1905
  %1915 = vst.msk [vmem:[%s4 + $0x7] sm:$0x1] %vm395, %v1892
  %1916 = vst.msk [vmem:[%s4 + $0xf] sm:$0x1] %vm395, %v1894
  %1917 = vst.msk [vmem:[%s4 + $0x17] sm:$0x1] %vm395, %v1896
  %1918 = vst.msk [vmem:[%s4 + $0x1f] sm:$0x1] %vm395, %v1898
  %1919 = vst.msk [vmem:[%s4 + $0x27] sm:$0x1] %vm395, %v1900
  %1920 = vst.msk [vmem:[%s4 + $0x2f] sm:$0x1] %vm395, %v1902
  %1921 = vst.msk [vmem:[%s4 + $0x37] sm:$0x1] %vm395, %v1904
  %1922 = vst.msk [vmem:[%s4 + $0x3f] sm:$0x1] %vm395, %v1906
  %1923 = vrot.lane.b32.xlu0 %v1808, 32
  %v1924 = vpop.permute.xlu0 %1923
  %1926 = vst.msk [vmem:[#allocation2] sm:$0xff] %vm43, %v1924
  %1928 = vrot.lane.b32.xlu0 %v1802, 96
  %v1929 = vpop.permute.xlu0 %1928
  %1931 = vst.msk [vmem:[%s182] sm:$0xff] %vm43, %v1929
  // Predicated region
  $region22: #{simple_model_forward.2} parent=0 // pred_check
    _
  $region23: #{simple_model_forward.2} parent=0 // pred_check_branch
    %1933 = sbr.rel (0) target = $region25
  $region24: #{simple_model_forward.2} parent=0 // pred_region
    _
  $region25: #{simple_model_forward.2} parent=0 // pred_fallthru
    _
  // Predicated region
  $region26: #{simple_model_forward.2} parent=0 // pred_check
    _
  $region27: #{simple_model_forward.2} parent=0 // pred_check_branch
    %1935 = sbr.rel (0) target = $region29
  $region28: #{simple_model_forward.2} parent=0 // pred_region
    _
  $region29: #{simple_model_forward.2} parent=0 // pred_fallthru
    _

</llo_original>
